<compile_context>
chip_gen: v7x
topology: tpu7x:2x2x1
jax: 0.10.0
libtpu: 0.0.40
codegen_flags: <defaults>
</compile_context>

<pallas_src>
import jax
import jax.numpy as jnp
from jax.experimental import pallas as pl
from jax.experimental.pallas import tpu as pltpu

KERNEL_SIZES = (3, 5)          # module default kernel_sizes=[3, 5]
DISTANCE_DECAY = 0.2
NUM_ROUTING_ITERS = 3
_NEG_BIG = -1e30               # finite stand-in for -inf in the causal mask


def _capsule_kernel(xf_ref, bands_ref, bias_ref, wf0_ref, wf1_ref, bf_ref, o_ref):
    # xf_ref:  (TBL, C)        flattened (tb, L, C) tile, f32
    # bands_ref: (2*TBL, TBL)  block-diag stacked k=3 / k=5 bands, bf16
    # bias_ref:  (TBL, TBL)    causal + distance-decay bias, cross-batch = _NEG_BIG, f32
    # wf0_ref / wf1_ref: (C, C) fusion weight halves, bf16
    # bf_ref: (1, C) fusion bias, f32
    # o_ref:  (TBL, C)
    TBL, C = xf_ref.shape
    cd = jnp.bfloat16  # MXU-native operand dtype (f32 accumulation everywhere)

    x = xf_ref[...]                      # (TBL, C) f32 (input already f32)
    x16 = x.astype(cd)                   # single cast per grid step
    bands = bands_ref[...]               # pre-cast bf16
    attn_bias = bias_ref[...]            # f32
    wf0 = wf0_ref[...]                   # bf16
    wf1 = wf1_ref[...]                   # bf16
    bfv = bf_ref[...]                    # (1, C) f32

    # Multi-scale causal moving average for the whole tile in ONE matmul:
    # rows [0:TBL] are the k=3 trend, rows [TBL:2*TBL] the k=5 trend.
    trends = jnp.dot(bands, x16, preferred_element_type=jnp.float32)   # (2*TBL, C)
    t0 = trends[:TBL]
    t1 = trends[TBL:]
    s0 = x - t0
    s1 = x - t1

    def squash(s):
        sq = jnp.sum(s * s, axis=-1, keepdims=True)
        norm = jnp.sqrt(sq)
        # Exact denominators (no approx reciprocal): this feeds the routing logits.
        return (sq / ((1.0 + sq) * (norm + 1e-9))) * s

    def dynamic_routing(u0, u1):
        # 2-capsule softmax == sigmoid of the logit difference (exact, one EUP op).
        b0 = jnp.zeros((TBL, 1), jnp.float32)
        b1 = jnp.zeros((TBL, 1), jnp.float32)
        v = None
        for i in range(NUM_ROUTING_ITERS):
            c0 = jax.nn.sigmoid(b0 - b1)
            s = c0 * u0 + (1.0 - c0) * u1
            v = squash(s)
            if i < NUM_ROUTING_ITERS - 1:
                b0 = b0 + jnp.sum(u0 * v, axis=-1, keepdims=True)
                b1 = b1 + jnp.sum(u1 * v, axis=-1, keepdims=True)
        return v

    def time_attention(v):
        # Block-diagonal attention over the whole (TBL, C) tile in 2 matmuls + 1
        # row-dense softmax; cross-batch bias entries are _NEG_BIG (finite).
        v16 = v.astype(cd)
        sim = jnp.dot(v16, v16.T, preferred_element_type=jnp.float32)   # (TBL, TBL)
        w = sim + attn_bias
        w = w - jnp.max(w, axis=-1, keepdims=True)
        e = jnp.exp(w)
        inv = pl.reciprocal(jnp.sum(e, axis=-1, keepdims=True), approx=True)
        attn = (e * inv).astype(cd)
        return jnp.dot(attn, v16, preferred_element_type=jnp.float32)   # (TBL, C)

    seasonal_fused = dynamic_routing(s0, s1)
    trend_fused = dynamic_routing(t0, t1)

    s_att = time_attention(seasonal_fused)
    t_att = time_attention(trend_fused)

    # Fusion linear: concat([s, t], -1) @ Wf + bf, split into two dots.
    out = (jnp.dot(s_att.astype(cd), wf0, preferred_element_type=jnp.float32)
           + jnp.dot(t_att.astype(cd), wf1, preferred_element_type=jnp.float32)
           + bfv)
    o_ref[...] = out.astype(o_ref.dtype)            # one tile-wide store per step


def _pick_batch_tile(n, seq_len, max_flat_tile):
    """Largest divisor tb of n with tb*seq_len <= max_flat_tile."""
    cap = max(1, min(n, max_flat_tile // max(seq_len, 1)))
    for d in range(cap, 0, -1):
        if n % d == 0:
            return d
    return 1


def capsule_forward(x, wf, bf, *, max_flat_tile=256):
    """x: (N, L, C) f32; wf: (2C, C) (= torch fusion.weight.T); bf: (1, C)."""
    N, L, C = x.shape
    f32 = jnp.float32

    # tb*L is the flattened tile height: large enough to M-fill the MXU and
    # amortize per-step pipeline overhead (no grid>=2 constraint — extra steps are
    # pure serialization on v5e/v6e), small enough that the (tb*L)^2 constants
    # stay a few hundred KB against v7x's 64 MiB VMEM.
    tb = _pick_batch_tile(N, L, max_flat_tile)
    tbl = tb * L
    steps = N // tb

    # --- batch-invariant constants (built once, VMEM-resident across the grid) ---
    idx = jnp.arange(L, dtype=jnp.int32)
    diff = (idx[:, None] - idx[None, :]).astype(f32)          # i - j
    causal = diff >= 0
    eye_tb = jnp.eye(tb, dtype=f32)

    # (2*tbl, tbl) block-diagonal stacked moving-average bands, pre-cast to bf16.
    bands = jnp.concatenate(
        [jnp.kron(eye_tb, jnp.where(causal & (diff < k), f32(1.0 / k), f32(0.0)))
         for k in KERNEL_SIZES],
        axis=0).astype(jnp.bfloat16)

    # (tbl, tbl) attention bias: causal mask + distance decay inside each batch
    # block, large finite negative everywhere else (cross-batch & non-causal).
    local_bias = jnp.where(causal, -DISTANCE_DECAY * diff, f32(_NEG_BIG))   # (L, L)
    block_mask = jnp.kron(eye_tb, jnp.ones((L, L), f32)) > 0.5
    attn_bias = jnp.where(block_mask, jnp.tile(local_bias, (tb, tb)),
                          f32(_NEG_BIG)).astype(f32)                        # (tbl, tbl)

    wf0 = wf[:C].astype(jnp.bfloat16)          # seasonal half of fusion weight
    wf1 = wf[C:].astype(jnp.bfloat16)          # trend half of fusion weight
    bf2 = bf.reshape(1, C).astype(f32)

    xf = x.reshape(N * L, C)                   # flatten batch into sublanes

    # Advisory cost estimate (matmuls + attention exps; rough but free).
    flops = steps * (2 * (2 * tbl) * tbl * C      # bands matmul
                     + 2 * (4 * tbl * tbl * C)    # two attentions (sim + attn@V)
                     + 4 * tbl * C * C)           # fusion dots
    transcendentals = steps * (2 * tbl * tbl + 12 * tbl)
    bytes_accessed = (N * L * C * 4 * 2 + bands.size * 2 + attn_bias.size * 4
                      + 2 * C * C * 2 + C * 4)

    out_flat = pl.pallas_call(
        _capsule_kernel,
        out_shape=jax.ShapeDtypeStruct((N * L, C), x.dtype),
        grid_spec=pltpu.PrefetchScalarGridSpec(
            num_scalar_prefetch=0,
            grid=(steps,),
            in_specs=[
                pl.BlockSpec((tbl, C), lambda b: (b, 0)),            # x tile
                pl.BlockSpec((2 * tbl, tbl), lambda b: (0, 0)),      # stacked bands
                pl.BlockSpec((tbl, tbl), lambda b: (0, 0)),          # attn bias
                pl.BlockSpec((C, C), lambda b: (0, 0)),              # wf seasonal half
                pl.BlockSpec((C, C), lambda b: (0, 0)),              # wf trend half
                pl.BlockSpec((1, C), lambda b: (0, 0)),              # fusion bias
            ],
            out_specs=pl.BlockSpec((tbl, C), lambda b: (b, 0)),
        ),
        compiler_params=pltpu.CompilerParams(
            dimension_semantics=("parallel",)),
        cost_estimate=pl.CostEstimate(flops=flops,
                                      transcendentals=transcendentals,
                                      bytes_accessed=bytes_accessed),
    )(xf, bands, attn_bias, wf0, wf1, bf2)

    return out_flat.reshape(N, L, C)


# --- pure-JAX reference (mirrors the PyTorch forward) for validation ---
def capsule_reference(x, wf, bf):
    N, L, C = x.shape
    idx = jnp.arange(L)
    diff = idx[:, None] - idx[None, :]
    causal = diff >= 0

    trends, seasonals = [], []
    for k in KERNEL_SIZES:
        A = jnp.where(causal & (diff < k), 1.0 / k, 0.0).astype(jnp.float32)
        t = jnp.einsum('ij,njc->nic', A, x)
        trends.append(t)
        seasonals.append(x - t)

    def routing(us, iters):
        u = jnp.stack(us, axis=2)                       # (N, L, M, C)
        logits = jnp.zeros(u.shape[:3], jnp.float32)
        v = None
        for i in range(iters):
            c = jax.nn.softmax(logits, axis=-1)
            s = jnp.sum(c[..., None] * u, axis=2)
            sq = jnp.sum(s * s, -1, keepdims=True)
            norm = jnp.sqrt(sq)
            v = (sq / (1.0 + sq)) * s / (norm + 1e-9)
            if i < iters - 1:
                logits = logits + jnp.sum(u * v[:, :, None, :], axis=-1)
        return v

    sf = routing(seasonals, NUM_ROUTING_ITERS)
    tf = routing(trends, NUM_ROUTING_ITERS)

    def time_attn(v):
        sim = jnp.einsum('nlc,nmc->nlm', v, v)
        w = jnp.where(causal[None],
                      sim - DISTANCE_DECAY * diff[None].astype(jnp.float32),
                      -jnp.inf)
        a = jax.nn.softmax(w, axis=-1)
        return jnp.einsum('nlm,nmc->nlc', a, v)

    sa = time_attn(sf)
    ta = time_attn(tf)
    return jnp.concatenate([sa, ta], axis=-1) @ wf + bf[0]


if __name__ == "__main__":
    N, L, D_MODEL = 4, 16, 32   # batch, seq_len, d_model  -> tile = whole batch, grid = 1

    key = jax.random.PRNGKey(0)
    kx, kw, kb = jax.random.split(key, 3)

    x = jax.random.normal(kx, (N, L, D_MODEL), dtype=jnp.float32)

    # fusion = nn.Linear(2*d_model, d_model); store transposed weight (2C, C) + bias (1, C)
    bound = 1.0 / jnp.sqrt(2.0 * D_MODEL)
    wf = jax.random.uniform(kw, (2 * D_MODEL, D_MODEL), jnp.float32, -bound, bound)
    bf = jax.random.uniform(kb, (1, D_MODEL), jnp.float32, -bound, bound)
    # NOTE: Linear_Seasonal / Linear_Trend / alpha are defined in __init__ but unused
    # in the single-argument forward path, so they are not materialized here.

    out = jax.block_until_ready(capsule_forward(x, wf, bf))
    ref = jax.block_until_ready(capsule_reference(x, wf, bf))

    assert out.shape == (N, L, D_MODEL)
    # bf16 MXU operands + approx reciprocal on the attention softmax denominator
    # => slightly looser tolerance than pure f32.
    max_err = float(jnp.max(jnp.abs(out - ref)))
    assert jnp.allclose(out, ref, rtol=2e-2, atol=2e-2), max_err

    print("KERNEL_OK")
</pallas_src>

<mosaic_0001>
module attributes {stable_mosaic.version = 11 : i64} {
  func.func @_capsule_kernel(%arg0: i32, %arg1: memref<64x32xf32, #tpu.memory_space<vmem>>, %arg2: memref<128x64xbf16, #tpu.memory_space<vmem>>, %arg3: memref<64x64xf32, #tpu.memory_space<vmem>>, %arg4: memref<32x32xbf16, #tpu.memory_space<vmem>>, %arg5: memref<32x32xbf16, #tpu.memory_space<vmem>>, %arg6: memref<1x32xf32, #tpu.memory_space<vmem>>, %arg7: memref<64x32xf32, #tpu.memory_space<vmem>>) attributes {dimension_semantics = [#tpu.dimension_semantics<parallel>], iteration_bounds = array<i64: 1>, scalar_prefetch = 0 : i64, scratch_operands = 0 : i64, tpu.core_type = #tpu.core_type<tc>, window_params = [{transform_indices = @transform_0, window_bounds = array<i64: 64, 32>}, {pipeline_mode = #tpu.pipeline_mode<synchronous>, transform_indices = @transform_1, window_bounds = array<i64: 128, 64>}, {pipeline_mode = #tpu.pipeline_mode<synchronous>, transform_indices = @transform_2, window_bounds = array<i64: 64, 64>}, {pipeline_mode = #tpu.pipeline_mode<synchronous>, transform_indices = @transform_3, window_bounds = array<i64: 32, 32>}, {pipeline_mode = #tpu.pipeline_mode<synchronous>, transform_indices = @transform_4, window_bounds = array<i64: 32, 32>}, {pipeline_mode = #tpu.pipeline_mode<synchronous>, transform_indices = @transform_5, window_bounds = array<i64: 1, 32>}, {transform_indices = @transform_6, window_bounds = array<i64: 64, 32>}]} {
    %c0 = arith.constant 0 : index
    %c0_0 = arith.constant 0 : index
    %0 = vector.load %arg1[%c0, %c0_0] : memref<64x32xf32, #tpu.memory_space<vmem>>, vector<64x32xf32>
    %1 = arith.truncf %0 : vector<64x32xf32> to vector<64x32xbf16>
    %c0_1 = arith.constant 0 : index
    %c0_2 = arith.constant 0 : index
    %2 = vector.load %arg2[%c0_1, %c0_2] : memref<128x64xbf16, #tpu.memory_space<vmem>>, vector<128x64xbf16>
    %c0_3 = arith.constant 0 : index
    %c0_4 = arith.constant 0 : index
    %3 = vector.load %arg3[%c0_3, %c0_4] : memref<64x64xf32, #tpu.memory_space<vmem>>, vector<64x64xf32>
    %c0_5 = arith.constant 0 : index
    %c0_6 = arith.constant 0 : index
    %4 = vector.load %arg4[%c0_5, %c0_6] : memref<32x32xbf16, #tpu.memory_space<vmem>>, vector<32x32xbf16>
    %c0_7 = arith.constant 0 : index
    %c0_8 = arith.constant 0 : index
    %5 = vector.load %arg5[%c0_7, %c0_8] : memref<32x32xbf16, #tpu.memory_space<vmem>>, vector<32x32xbf16>
    %c0_9 = arith.constant 0 : index
    %c0_10 = arith.constant 0 : index
    %6 = vector.load %arg6[%c0_9, %c0_10] : memref<1x32xf32, #tpu.memory_space<vmem>>, vector<1x32xf32>
    %cst = arith.constant dense<0.000000e+00> : vector<128x32xf32>
    %7 = tpu.matmul %2, %1, %cst {dimension_numbers = #tpu.dot_dimension_numbers<[1], [0], [0], [1], [0, 0, 1, 1], [], []>} : vector<128x64xbf16>, vector<64x32xbf16>, vector<128x32xf32> -> vector<128x32xf32>
    %8 = vector.extract_strided_slice %7 {offsets = [0, 0], sizes = [64, 32], strides = [1, 1]} : vector<128x32xf32> to vector<64x32xf32>
    %9 = vector.extract_strided_slice %7 {offsets = [64, 0], sizes = [64, 32], strides = [1, 1]} : vector<128x32xf32> to vector<64x32xf32>
    %10 = arith.subf %0, %8 : vector<64x32xf32>
    %11 = arith.subf %0, %9 : vector<64x32xf32>
    %cst_11 = arith.constant 0.000000e+00 : f32
    %12 = vector.broadcast %cst_11 : f32 to vector<64x1xf32>
    %cst_12 = arith.constant 0.000000e+00 : f32
    %13 = vector.broadcast %cst_12 : f32 to vector<64x1xf32>
    %14 = arith.subf %12, %13 : vector<64x1xf32>
    %15 = arith.negf %14 : vector<64x1xf32>
    %16 = math.exp %15 : vector<64x1xf32>
    %cst_13 = arith.constant 1.000000e+00 : f32
    %17 = vector.broadcast %cst_13 : f32 to vector<64x1xf32>
    %18 = arith.addf %17, %16 : vector<64x1xf32>
    %19 = arith.divf %17, %18 : vector<64x1xf32>
    %20 = vector.broadcast %19 : vector<64x1xf32> to vector<64x32xf32>
    %21 = arith.mulf %20, %10 : vector<64x32xf32>
    %cst_14 = arith.constant 1.000000e+00 : f32
    %22 = vector.broadcast %cst_14 : f32 to vector<64x1xf32>
    %23 = arith.subf %22, %19 : vector<64x1xf32>
    %24 = vector.broadcast %23 : vector<64x1xf32> to vector<64x32xf32>
    %25 = arith.mulf %24, %11 : vector<64x32xf32>
    %26 = arith.addf %21, %25 : vector<64x32xf32>
    %27 = arith.mulf %26, %26 : vector<64x32xf32>
    %cst_15 = arith.constant dense<0.000000e+00> : vector<64xf32>
    %28 = vector.multi_reduction <add>, %27, %cst_15 [1] : vector<64x32xf32> to vector<64xf32>
    %29 = vector.shape_cast %28 : vector<64xf32> to vector<64x1xf32>
    %30 = math.sqrt %29 : vector<64x1xf32>
    %cst_16 = arith.constant 1.000000e+00 : f32
    %31 = vector.broadcast %cst_16 : f32 to vector<64x1xf32>
    %32 = arith.addf %31, %29 : vector<64x1xf32>
    %cst_17 = arith.constant 9.99999971E-10 : f32
    %33 = vector.broadcast %cst_17 : f32 to vector<64x1xf32>
    %34 = arith.addf %30, %33 : vector<64x1xf32>
    %35 = arith.mulf %32, %34 : vector<64x1xf32>
    %36 = arith.divf %29, %35 : vector<64x1xf32>
    %37 = vector.broadcast %36 : vector<64x1xf32> to vector<64x32xf32>
    %38 = arith.mulf %37, %26 : vector<64x32xf32>
    %39 = arith.mulf %10, %38 : vector<64x32xf32>
    %cst_18 = arith.constant dense<0.000000e+00> : vector<64xf32>
    %40 = vector.multi_reduction <add>, %39, %cst_18 [1] : vector<64x32xf32> to vector<64xf32>
    %41 = vector.shape_cast %40 : vector<64xf32> to vector<64x1xf32>
    %42 = arith.addf %12, %41 : vector<64x1xf32>
    %43 = arith.mulf %11, %38 : vector<64x32xf32>
    %cst_19 = arith.constant dense<0.000000e+00> : vector<64xf32>
    %44 = vector.multi_reduction <add>, %43, %cst_19 [1] : vector<64x32xf32> to vector<64xf32>
    %45 = vector.shape_cast %44 : vector<64xf32> to vector<64x1xf32>
    %46 = arith.addf %13, %45 : vector<64x1xf32>
    %47 = arith.subf %42, %46 : vector<64x1xf32>
    %48 = arith.negf %47 : vector<64x1xf32>
    %49 = math.exp %48 : vector<64x1xf32>
    %cst_20 = arith.constant 1.000000e+00 : f32
    %50 = vector.broadcast %cst_20 : f32 to vector<64x1xf32>
    %51 = arith.addf %50, %49 : vector<64x1xf32>
    %52 = arith.divf %50, %51 : vector<64x1xf32>
    %53 = vector.broadcast %52 : vector<64x1xf32> to vector<64x32xf32>
    %54 = arith.mulf %53, %10 : vector<64x32xf32>
    %cst_21 = arith.constant 1.000000e+00 : f32
    %55 = vector.broadcast %cst_21 : f32 to vector<64x1xf32>
    %56 = arith.subf %55, %52 : vector<64x1xf32>
    %57 = vector.broadcast %56 : vector<64x1xf32> to vector<64x32xf32>
    %58 = arith.mulf %57, %11 : vector<64x32xf32>
    %59 = arith.addf %54, %58 : vector<64x32xf32>
    %60 = arith.mulf %59, %59 : vector<64x32xf32>
    %cst_22 = arith.constant dense<0.000000e+00> : vector<64xf32>
    %61 = vector.multi_reduction <add>, %60, %cst_22 [1] : vector<64x32xf32> to vector<64xf32>
    %62 = vector.shape_cast %61 : vector<64xf32> to vector<64x1xf32>
    %63 = math.sqrt %62 : vector<64x1xf32>
    %cst_23 = arith.constant 1.000000e+00 : f32
    %64 = vector.broadcast %cst_23 : f32 to vector<64x1xf32>
    %65 = arith.addf %64, %62 : vector<64x1xf32>
    %cst_24 = arith.constant 9.99999971E-10 : f32
    %66 = vector.broadcast %cst_24 : f32 to vector<64x1xf32>
    %67 = arith.addf %63, %66 : vector<64x1xf32>
    %68 = arith.mulf %65, %67 : vector<64x1xf32>
    %69 = arith.divf %62, %68 : vector<64x1xf32>
    %70 = vector.broadcast %69 : vector<64x1xf32> to vector<64x32xf32>
    %71 = arith.mulf %70, %59 : vector<64x32xf32>
    %72 = arith.mulf %10, %71 : vector<64x32xf32>
    %cst_25 = arith.constant dense<0.000000e+00> : vector<64xf32>
    %73 = vector.multi_reduction <add>, %72, %cst_25 [1] : vector<64x32xf32> to vector<64xf32>
    %74 = vector.shape_cast %73 : vector<64xf32> to vector<64x1xf32>
    %75 = arith.addf %42, %74 : vector<64x1xf32>
    %76 = arith.mulf %11, %71 : vector<64x32xf32>
    %cst_26 = arith.constant dense<0.000000e+00> : vector<64xf32>
    %77 = vector.multi_reduction <add>, %76, %cst_26 [1] : vector<64x32xf32> to vector<64xf32>
    %78 = vector.shape_cast %77 : vector<64xf32> to vector<64x1xf32>
    %79 = arith.addf %46, %78 : vector<64x1xf32>
    %80 = arith.subf %75, %79 : vector<64x1xf32>
    %81 = arith.negf %80 : vector<64x1xf32>
    %82 = math.exp %81 : vector<64x1xf32>
    %cst_27 = arith.constant 1.000000e+00 : f32
    %83 = vector.broadcast %cst_27 : f32 to vector<64x1xf32>
    %84 = arith.addf %83, %82 : vector<64x1xf32>
    %85 = arith.divf %83, %84 : vector<64x1xf32>
    %86 = vector.broadcast %85 : vector<64x1xf32> to vector<64x32xf32>
    %87 = arith.mulf %86, %10 : vector<64x32xf32>
    %cst_28 = arith.constant 1.000000e+00 : f32
    %88 = vector.broadcast %cst_28 : f32 to vector<64x1xf32>
    %89 = arith.subf %88, %85 : vector<64x1xf32>
    %90 = vector.broadcast %89 : vector<64x1xf32> to vector<64x32xf32>
    %91 = arith.mulf %90, %11 : vector<64x32xf32>
    %92 = arith.addf %87, %91 : vector<64x32xf32>
    %93 = arith.mulf %92, %92 : vector<64x32xf32>
    %cst_29 = arith.constant dense<0.000000e+00> : vector<64xf32>
    %94 = vector.multi_reduction <add>, %93, %cst_29 [1] : vector<64x32xf32> to vector<64xf32>
    %95 = vector.shape_cast %94 : vector<64xf32> to vector<64x1xf32>
    %96 = math.sqrt %95 : vector<64x1xf32>
    %cst_30 = arith.constant 1.000000e+00 : f32
    %97 = vector.broadcast %cst_30 : f32 to vector<64x1xf32>
    %98 = arith.addf %97, %95 : vector<64x1xf32>
    %cst_31 = arith.constant 9.99999971E-10 : f32
    %99 = vector.broadcast %cst_31 : f32 to vector<64x1xf32>
    %100 = arith.addf %96, %99 : vector<64x1xf32>
    %101 = arith.mulf %98, %100 : vector<64x1xf32>
    %102 = arith.divf %95, %101 : vector<64x1xf32>
    %103 = vector.broadcast %102 : vector<64x1xf32> to vector<64x32xf32>
    %104 = arith.mulf %103, %92 : vector<64x32xf32>
    %cst_32 = arith.constant 0.000000e+00 : f32
    %105 = vector.broadcast %cst_32 : f32 to vector<64x1xf32>
    %cst_33 = arith.constant 0.000000e+00 : f32
    %106 = vector.broadcast %cst_33 : f32 to vector<64x1xf32>
    %107 = arith.subf %105, %106 : vector<64x1xf32>
    %108 = arith.negf %107 : vector<64x1xf32>
    %109 = math.exp %108 : vector<64x1xf32>
    %cst_34 = arith.constant 1.000000e+00 : f32
    %110 = vector.broadcast %cst_34 : f32 to vector<64x1xf32>
    %111 = arith.addf %110, %109 : vector<64x1xf32>
    %112 = arith.divf %110, %111 : vector<64x1xf32>
    %113 = vector.broadcast %112 : vector<64x1xf32> to vector<64x32xf32>
    %114 = arith.mulf %113, %8 : vector<64x32xf32>
    %cst_35 = arith.constant 1.000000e+00 : f32
    %115 = vector.broadcast %cst_35 : f32 to vector<64x1xf32>
    %116 = arith.subf %115, %112 : vector<64x1xf32>
    %117 = vector.broadcast %116 : vector<64x1xf32> to vector<64x32xf32>
    %118 = arith.mulf %117, %9 : vector<64x32xf32>
    %119 = arith.addf %114, %118 : vector<64x32xf32>
    %120 = arith.mulf %119, %119 : vector<64x32xf32>
    %cst_36 = arith.constant dense<0.000000e+00> : vector<64xf32>
    %121 = vector.multi_reduction <add>, %120, %cst_36 [1] : vector<64x32xf32> to vector<64xf32>
    %122 = vector.shape_cast %121 : vector<64xf32> to vector<64x1xf32>
    %123 = math.sqrt %122 : vector<64x1xf32>
    %cst_37 = arith.constant 1.000000e+00 : f32
    %124 = vector.broadcast %cst_37 : f32 to vector<64x1xf32>
    %125 = arith.addf %124, %122 : vector<64x1xf32>
    %cst_38 = arith.constant 9.99999971E-10 : f32
    %126 = vector.broadcast %cst_38 : f32 to vector<64x1xf32>
    %127 = arith.addf %123, %126 : vector<64x1xf32>
    %128 = arith.mulf %125, %127 : vector<64x1xf32>
    %129 = arith.divf %122, %128 : vector<64x1xf32>
    %130 = vector.broadcast %129 : vector<64x1xf32> to vector<64x32xf32>
    %131 = arith.mulf %130, %119 : vector<64x32xf32>
    %132 = arith.mulf %8, %131 : vector<64x32xf32>
    %cst_39 = arith.constant dense<0.000000e+00> : vector<64xf32>
    %133 = vector.multi_reduction <add>, %132, %cst_39 [1] : vector<64x32xf32> to vector<64xf32>
    %134 = vector.shape_cast %133 : vector<64xf32> to vector<64x1xf32>
    %135 = arith.addf %105, %134 : vector<64x1xf32>
    %136 = arith.mulf %9, %131 : vector<64x32xf32>
    %cst_40 = arith.constant dense<0.000000e+00> : vector<64xf32>
    %137 = vector.multi_reduction <add>, %136, %cst_40 [1] : vector<64x32xf32> to vector<64xf32>
    %138 = vector.shape_cast %137 : vector<64xf32> to vector<64x1xf32>
    %139 = arith.addf %106, %138 : vector<64x1xf32>
    %140 = arith.subf %135, %139 : vector<64x1xf32>
    %141 = arith.negf %140 : vector<64x1xf32>
    %142 = math.exp %141 : vector<64x1xf32>
    %cst_41 = arith.constant 1.000000e+00 : f32
    %143 = vector.broadcast %cst_41 : f32 to vector<64x1xf32>
    %144 = arith.addf %143, %142 : vector<64x1xf32>
    %145 = arith.divf %143, %144 : vector<64x1xf32>
    %146 = vector.broadcast %145 : vector<64x1xf32> to vector<64x32xf32>
    %147 = arith.mulf %146, %8 : vector<64x32xf32>
    %cst_42 = arith.constant 1.000000e+00 : f32
    %148 = vector.broadcast %cst_42 : f32 to vector<64x1xf32>
    %149 = arith.subf %148, %145 : vector<64x1xf32>
    %150 = vector.broadcast %149 : vector<64x1xf32> to vector<64x32xf32>
    %151 = arith.mulf %150, %9 : vector<64x32xf32>
    %152 = arith.addf %147, %151 : vector<64x32xf32>
    %153 = arith.mulf %152, %152 : vector<64x32xf32>
    %cst_43 = arith.constant dense<0.000000e+00> : vector<64xf32>
    %154 = vector.multi_reduction <add>, %153, %cst_43 [1] : vector<64x32xf32> to vector<64xf32>
    %155 = vector.shape_cast %154 : vector<64xf32> to vector<64x1xf32>
    %156 = math.sqrt %155 : vector<64x1xf32>
    %cst_44 = arith.constant 1.000000e+00 : f32
    %157 = vector.broadcast %cst_44 : f32 to vector<64x1xf32>
    %158 = arith.addf %157, %155 : vector<64x1xf32>
    %cst_45 = arith.constant 9.99999971E-10 : f32
    %159 = vector.broadcast %cst_45 : f32 to vector<64x1xf32>
    %160 = arith.addf %156, %159 : vector<64x1xf32>
    %161 = arith.mulf %158, %160 : vector<64x1xf32>
    %162 = arith.divf %155, %161 : vector<64x1xf32>
    %163 = vector.broadcast %162 : vector<64x1xf32> to vector<64x32xf32>
    %164 = arith.mulf %163, %152 : vector<64x32xf32>
    %165 = arith.mulf %8, %164 : vector<64x32xf32>
    %cst_46 = arith.constant dense<0.000000e+00> : vector<64xf32>
    %166 = vector.multi_reduction <add>, %165, %cst_46 [1] : vector<64x32xf32> to vector<64xf32>
    %167 = vector.shape_cast %166 : vector<64xf32> to vector<64x1xf32>
    %168 = arith.addf %135, %167 : vector<64x1xf32>
    %169 = arith.mulf %9, %164 : vector<64x32xf32>
    %cst_47 = arith.constant dense<0.000000e+00> : vector<64xf32>
    %170 = vector.multi_reduction <add>, %169, %cst_47 [1] : vector<64x32xf32> to vector<64xf32>
    %171 = vector.shape_cast %170 : vector<64xf32> to vector<64x1xf32>
    %172 = arith.addf %139, %171 : vector<64x1xf32>
    %173 = arith.subf %168, %172 : vector<64x1xf32>
    %174 = arith.negf %173 : vector<64x1xf32>
    %175 = math.exp %174 : vector<64x1xf32>
    %cst_48 = arith.constant 1.000000e+00 : f32
    %176 = vector.broadcast %cst_48 : f32 to vector<64x1xf32>
    %177 = arith.addf %176, %175 : vector<64x1xf32>
    %178 = arith.divf %176, %177 : vector<64x1xf32>
    %179 = vector.broadcast %178 : vector<64x1xf32> to vector<64x32xf32>
    %180 = arith.mulf %179, %8 : vector<64x32xf32>
    %cst_49 = arith.constant 1.000000e+00 : f32
    %181 = vector.broadcast %cst_49 : f32 to vector<64x1xf32>
    %182 = arith.subf %181, %178 : vector<64x1xf32>
    %183 = vector.broadcast %182 : vector<64x1xf32> to vector<64x32xf32>
    %184 = arith.mulf %183, %9 : vector<64x32xf32>
    %185 = arith.addf %180, %184 : vector<64x32xf32>
    %186 = arith.mulf %185, %185 : vector<64x32xf32>
    %cst_50 = arith.constant dense<0.000000e+00> : vector<64xf32>
    %187 = vector.multi_reduction <add>, %186, %cst_50 [1] : vector<64x32xf32> to vector<64xf32>
    %188 = vector.shape_cast %187 : vector<64xf32> to vector<64x1xf32>
    %189 = math.sqrt %188 : vector<64x1xf32>
    %cst_51 = arith.constant 1.000000e+00 : f32
    %190 = vector.broadcast %cst_51 : f32 to vector<64x1xf32>
    %191 = arith.addf %190, %188 : vector<64x1xf32>
    %cst_52 = arith.constant 9.99999971E-10 : f32
    %192 = vector.broadcast %cst_52 : f32 to vector<64x1xf32>
    %193 = arith.addf %189, %192 : vector<64x1xf32>
    %194 = arith.mulf %191, %193 : vector<64x1xf32>
    %195 = arith.divf %188, %194 : vector<64x1xf32>
    %196 = vector.broadcast %195 : vector<64x1xf32> to vector<64x32xf32>
    %197 = arith.mulf %196, %185 : vector<64x32xf32>
    %198 = arith.truncf %104 : vector<64x32xf32> to vector<64x32xbf16>
    %199 = tpu.transpose %198, [1, 0] : vector<64x32xbf16> -> vector<32x64xbf16>
    %cst_53 = arith.constant dense<0.000000e+00> : vector<64x64xf32>
    %200 = tpu.matmul %198, %199, %cst_53 {dimension_numbers = #tpu.dot_dimension_numbers<[1], [0], [0], [1], [0, 0, 1, 1], [], []>} : vector<64x32xbf16>, vector<32x64xbf16>, vector<64x64xf32> -> vector<64x64xf32>
    %201 = arith.addf %200, %3 : vector<64x64xf32>
    %cst_54 = arith.constant dense<0xFF800000> : vector<64xf32>
    %202 = vector.multi_reduction <maximumf>, %201, %cst_54 [1] : vector<64x64xf32> to vector<64xf32>
    %203 = vector.shape_cast %202 : vector<64xf32> to vector<64x1xf32>
    %204 = vector.broadcast %203 : vector<64x1xf32> to vector<64x64xf32>
    %205 = arith.subf %201, %204 : vector<64x64xf32>
    %206 = math.exp %205 : vector<64x64xf32>
    %cst_55 = arith.constant dense<0.000000e+00> : vector<64xf32>
    %207 = vector.multi_reduction <add>, %206, %cst_55 [1] : vector<64x64xf32> to vector<64xf32>
    %208 = vector.shape_cast %207 : vector<64xf32> to vector<64x1xf32>
    %209 = tpu.reciprocal %208 {approx = true} : vector<64x1xf32> -> vector<64x1xf32>
    %210 = vector.broadcast %209 : vector<64x1xf32> to vector<64x64xf32>
    %211 = arith.mulf %206, %210 : vector<64x64xf32>
    %212 = arith.truncf %211 : vector<64x64xf32> to vector<64x64xbf16>
    %cst_56 = arith.constant dense<0.000000e+00> : vector<64x32xf32>
    %213 = tpu.matmul %212, %198, %cst_56 {dimension_numbers = #tpu.dot_dimension_numbers<[1], [0], [0], [1], [0, 0, 1, 1], [], []>} : vector<64x64xbf16>, vector<64x32xbf16>, vector<64x32xf32> -> vector<64x32xf32>
    %214 = arith.truncf %197 : vector<64x32xf32> to vector<64x32xbf16>
    %215 = tpu.transpose %214, [1, 0] : vector<64x32xbf16> -> vector<32x64xbf16>
    %cst_57 = arith.constant dense<0.000000e+00> : vector<64x64xf32>
    %216 = tpu.matmul %214, %215, %cst_57 {dimension_numbers = #tpu.dot_dimension_numbers<[1], [0], [0], [1], [0, 0, 1, 1], [], []>} : vector<64x32xbf16>, vector<32x64xbf16>, vector<64x64xf32> -> vector<64x64xf32>
    %217 = arith.addf %216, %3 : vector<64x64xf32>
    %cst_58 = arith.constant dense<0xFF800000> : vector<64xf32>
    %218 = vector.multi_reduction <maximumf>, %217, %cst_58 [1] : vector<64x64xf32> to vector<64xf32>
    %219 = vector.shape_cast %218 : vector<64xf32> to vector<64x1xf32>
    %220 = vector.broadcast %219 : vector<64x1xf32> to vector<64x64xf32>
    %221 = arith.subf %217, %220 : vector<64x64xf32>
    %222 = math.exp %221 : vector<64x64xf32>
    %cst_59 = arith.constant dense<0.000000e+00> : vector<64xf32>
    %223 = vector.multi_reduction <add>, %222, %cst_59 [1] : vector<64x64xf32> to vector<64xf32>
    %224 = vector.shape_cast %223 : vector<64xf32> to vector<64x1xf32>
    %225 = tpu.reciprocal %224 {approx = true} : vector<64x1xf32> -> vector<64x1xf32>
    %226 = vector.broadcast %225 : vector<64x1xf32> to vector<64x64xf32>
    %227 = arith.mulf %222, %226 : vector<64x64xf32>
    %228 = arith.truncf %227 : vector<64x64xf32> to vector<64x64xbf16>
    %cst_60 = arith.constant dense<0.000000e+00> : vector<64x32xf32>
    %229 = tpu.matmul %228, %214, %cst_60 {dimension_numbers = #tpu.dot_dimension_numbers<[1], [0], [0], [1], [0, 0, 1, 1], [], []>} : vector<64x64xbf16>, vector<64x32xbf16>, vector<64x32xf32> -> vector<64x32xf32>
    %230 = arith.truncf %213 : vector<64x32xf32> to vector<64x32xbf16>
    %cst_61 = arith.constant dense<0.000000e+00> : vector<64x32xf32>
    %231 = tpu.matmul %230, %4, %cst_61 {dimension_numbers = #tpu.dot_dimension_numbers<[1], [0], [0], [1], [0, 0, 1, 1], [], []>} : vector<64x32xbf16>, vector<32x32xbf16>, vector<64x32xf32> -> vector<64x32xf32>
    %232 = arith.truncf %229 : vector<64x32xf32> to vector<64x32xbf16>
    %cst_62 = arith.constant dense<0.000000e+00> : vector<64x32xf32>
    %233 = tpu.matmul %232, %5, %cst_62 {dimension_numbers = #tpu.dot_dimension_numbers<[1], [0], [0], [1], [0, 0, 1, 1], [], []>} : vector<64x32xbf16>, vector<32x32xbf16>, vector<64x32xf32> -> vector<64x32xf32>
    %234 = arith.addf %231, %233 : vector<64x32xf32>
    %235 = vector.broadcast %6 : vector<1x32xf32> to vector<64x32xf32>
    %236 = arith.addf %234, %235 : vector<64x32xf32>
    %c0_63 = arith.constant 0 : index
    %c0_64 = arith.constant 0 : index
    %237 = vector.load %arg7[%c0_63, %c0_64] : memref<64x32xf32, #tpu.memory_space<vmem>>, vector<64x32xf32>
    tpu.vector_store %arg7[%c0_63, %c0_64], %236 {strides = array<i32>} : memref<64x32xf32, #tpu.memory_space<vmem>>, vector<64x32xf32>,
    return
  }
  func.func @transform_0(%arg0: i32) -> (i32, i32) {
    %c0_i32 = arith.constant 0 : i32
    %c0_i32_0 = arith.constant 0 : i32
    return %arg0, %c0_i32 : i32, i32
  }
  func.func @transform_1(%arg0: i32) -> (i32, i32) {
    %c0_i32 = arith.constant 0 : i32
    %c0_i32_0 = arith.constant 0 : i32
    %c0_i32_1 = arith.constant 0 : i32
    return %c0_i32, %c0_i32_0 : i32, i32
  }
  func.func @transform_2(%arg0: i32) -> (i32, i32) {
    %c0_i32 = arith.constant 0 : i32
    %c0_i32_0 = arith.constant 0 : i32
    %c0_i32_1 = arith.constant 0 : i32
    return %c0_i32, %c0_i32_0 : i32, i32
  }
  func.func @transform_3(%arg0: i32) -> (i32, i32) {
    %c0_i32 = arith.constant 0 : i32
    %c0_i32_0 = arith.constant 0 : i32
    %c0_i32_1 = arith.constant 0 : i32
    return %c0_i32, %c0_i32_0 : i32, i32
  }
  func.func @transform_4(%arg0: i32) -> (i32, i32) {
    %c0_i32 = arith.constant 0 : i32
    %c0_i32_0 = arith.constant 0 : i32
    %c0_i32_1 = arith.constant 0 : i32
    return %c0_i32, %c0_i32_0 : i32, i32
  }
  func.func @transform_5(%arg0: i32) -> (i32, i32) {
    %c0_i32 = arith.constant 0 : i32
    %c0_i32_0 = arith.constant 0 : i32
    %c0_i32_1 = arith.constant 0 : i32
    return %c0_i32, %c0_i32_0 : i32, i32
  }
  func.func @transform_6(%arg0: i32) -> (i32, i32) {
    %c0_i32 = arith.constant 0 : i32
    %c0_i32_0 = arith.constant 0 : i32
    return %arg0, %c0_i32 : i32, i32
  }
}

</mosaic_0001>

<llo_original>
// kernel: tpu_custom_call.1
$region0: #{tpu_custom_call.1}
  #allocation0 [shape = 'u32[]', space=smem, size = 0x4, offset = 0x4, fixed_abs, tag = 'smem constant byte address 0x4 - core index']
  #allocation1 [shape = 'u32[144,128]{1,0:T(1,128)}', space=vmem, size = 0x12000, scoped, tag = 'internal scratch']
  %s0 = inlined_call_operand.vmem [shape: f32[64,32], index: 0, kind: input, shape index: {}]
  %s1 = inlined_call_operand.vmem [shape: bf16[128,64], index: 1, kind: input, shape index: {}]
  %s2 = inlined_call_operand.vmem [shape: f32[64,64], index: 2, kind: input, shape index: {}]
  %s3 = inlined_call_operand.vmem [shape: bf16[32,32], index: 3, kind: input, shape index: {}]
  %s4 = inlined_call_operand.vmem [shape: bf16[32,32], index: 4, kind: input, shape index: {}]
  %s5 = inlined_call_operand.vmem [shape: f32[1,32], index: 5, kind: input, shape index: {}]
  %s6 = inlined_call_operand.vmem [shape: f32[64,32], index: 6, kind: output, shape index: {}]
  %s7 = sld [smem:[#allocation0]]
  $region34: #{tpu_custom_call.1} parent=0
    _
  %s9 = ssub.s32 1, %s7
  %s10 = scalar_select 0, %s9, %s7
  // Predicated region
  $region2: #{tpu_custom_call.1} parent=0 // pred_check
    _
  $region3: #{tpu_custom_call.1} parent=0 // pred_check_branch
    %12 = sbr.rel (0) target = $region5
  $region4: #{tpu_custom_call.1} parent=0 // pred_region
    _
  $region5: #{tpu_custom_call.1} parent=0 // pred_fallthru
    _
  // Predicated region
  $region6: #{tpu_custom_call.1} parent=0 // pred_check
    _
  $region7: #{tpu_custom_call.1} parent=0 // pred_check_branch
    %14 = sbr.rel (0) target = $region9
  $region8: #{tpu_custom_call.1} parent=0 // pred_region
    _
  $region9: #{tpu_custom_call.1} parent=0 // pred_fallthru
    _
  // Predicated region
  $region10: #{tpu_custom_call.1} parent=0 // pred_check
    _
  $region11: #{tpu_custom_call.1} parent=0 // pred_check_branch
    %16 = sbr.rel (0) target = $region13
  $region12: #{tpu_custom_call.1} parent=0 // pred_region
    _
  $region13: #{tpu_custom_call.1} parent=0 // pred_fallthru
    _
  // Predicated region
  $region14: #{tpu_custom_call.1} parent=0 // pred_check
    _
  $region15: #{tpu_custom_call.1} parent=0 // pred_check_branch
    %18 = sbr.rel (0) target = $region17
  $region16: #{tpu_custom_call.1} parent=0 // pred_region
    _
  $region17: #{tpu_custom_call.1} parent=0 // pred_fallthru
    _
  // Predicated region
  $region18: #{tpu_custom_call.1} parent=0 // pred_check
    _
  $region19: #{tpu_custom_call.1} parent=0 // pred_check_branch
    %20 = sbr.rel (0) target = $region21
  $region20: #{tpu_custom_call.1} parent=0 // pred_region
    _
  $region21: #{tpu_custom_call.1} parent=0 // pred_fallthru
    _
  // Predicated region
  $region22: #{tpu_custom_call.1} parent=0 // pred_check
    _
  $region23: #{tpu_custom_call.1} parent=0 // pred_check_branch
    %22 = sbr.rel (0) target = $region25
  $region24: #{tpu_custom_call.1} parent=0 // pred_region
    _
  $region25: #{tpu_custom_call.1} parent=0 // pred_fallthru
    _
  %v24 = vld [vmem:[%s0] sm:$0xff]
  %v25 = vld [vmem:[%s0 + $0x8] sm:$0xff]
  %v26 = vld [vmem:[%s0 + $0x10] sm:$0xff]
  %v27 = vld [vmem:[%s0 + $0x18] sm:$0xff]
  %v28 = vld [vmem:[%s0 + $0x20] sm:$0xff]
  %v29 = vld [vmem:[%s0 + $0x28] sm:$0xff]
  %v30 = vld [vmem:[%s0 + $0x30] sm:$0xff]
  %v31 = vld [vmem:[%s0 + $0x38] sm:$0xff]
  %v32 = vpack.c.bf16 %v25, %v24
  %v33 = vpack.c.bf16 %v27, %v26
  %v34 = vpack.c.bf16 %v29, %v28
  %v35 = vpack.c.bf16 %v31, %v30
  %v36 = vld [vmem:[%s1] sm:$0xf]
  %v37 = vld [vmem:[%s1 + $0x4] sm:$0xf]
  %v38 = vld [vmem:[%s1 + $0x8] sm:$0xf]
  %v39 = vld [vmem:[%s1 + $0xc] sm:$0xf]
  %v40 = vld [vmem:[%s1 + $0x10] sm:$0xf]
  %v41 = vld [vmem:[%s1 + $0x14] sm:$0xf]
  %v42 = vld [vmem:[%s1 + $0x18] sm:$0xf]
  %v43 = vld [vmem:[%s1 + $0x1c] sm:$0xf]
  %v44 = vld [vmem:[%s1 + $0x20] sm:$0xf]
  %v45 = vld [vmem:[%s1 + $0x24] sm:$0xf]
  %v46 = vld [vmem:[%s1 + $0x28] sm:$0xf]
  %v47 = vld [vmem:[%s1 + $0x2c] sm:$0xf]
  %v48 = vld [vmem:[%s1 + $0x30] sm:$0xf]
  %v49 = vld [vmem:[%s1 + $0x34] sm:$0xf]
  %v50 = vld [vmem:[%s1 + $0x38] sm:$0xf]
  %v51 = vld [vmem:[%s1 + $0x3c] sm:$0xf]
  %v52 = vld [vmem:[%s2] sm:$0xff]
  %v53 = vld [vmem:[%s2 + $0x8] sm:$0xff]
  %v54 = vld [vmem:[%s2 + $0x10] sm:$0xff]
  %v55 = vld [vmem:[%s2 + $0x18] sm:$0xff]
  %v56 = vld [vmem:[%s2 + $0x20] sm:$0xff]
  %v57 = vld [vmem:[%s2 + $0x28] sm:$0xff]
  %v58 = vld [vmem:[%s2 + $0x30] sm:$0xff]
  %v59 = vld [vmem:[%s2 + $0x38] sm:$0xff]
  %v60 = vld [vmem:[%s3] sm:$0xf]
  %v61 = vld [vmem:[%s3 + $0x4] sm:$0xf]
  %v62 = vld [vmem:[%s3 + $0x8] sm:$0xf]
  %v63 = vld [vmem:[%s3 + $0xc] sm:$0xf]
  %v64 = vld [vmem:[%s4] sm:$0xf]
  %v65 = vld [vmem:[%s4 + $0x4] sm:$0xf]
  %v66 = vld [vmem:[%s4 + $0x8] sm:$0xf]
  %v67 = vld [vmem:[%s4 + $0xc] sm:$0xf]
  %v68 = vld [vmem:[%s5] sm:$0x1]
  %v85 = vunpack.c.l.b16 %v36
  %v86 = vunpack.c.l.b16 %v37
  %v87 = vunpack.c.l.b16 %v38
  %v88 = vunpack.c.l.b16 %v39
  %v89 = vunpack.c.l.b16 %v40
  %v90 = vunpack.c.l.b16 %v41
  %v91 = vunpack.c.l.b16 %v42
  %v92 = vunpack.c.l.b16 %v43
  %v93 = vunpack.c.l.b16 %v44
  %v94 = vunpack.c.l.b16 %v45
  %v95 = vunpack.c.l.b16 %v46
  %v96 = vunpack.c.l.b16 %v47
  %v97 = vunpack.c.l.b16 %v48
  %v98 = vunpack.c.l.b16 %v49
  %v99 = vunpack.c.l.b16 %v50
  %v100 = vunpack.c.l.b16 %v51
  %v101 = vpack.c.b16 %v86, %v85
  %v102 = vpack.c.b16 %v88, %v87
  %v103 = vpack.c.b16 %v90, %v89
  %v104 = vpack.c.b16 %v92, %v91
  %v105 = vpack.c.b16 %v94, %v93
  %v106 = vpack.c.b16 %v96, %v95
  %v107 = vpack.c.b16 %v98, %v97
  %v108 = vpack.c.b16 %v100, %v99
  %vm109 = vcmask 523264
  %v111 = vsel %vm109, %v101, 0
  %v114 = vsel %vm109, %v102, 0
  %v117 = vsel %vm109, %v103, 0
  %v120 = vsel %vm109, %v104, 0
  %v123 = vsel %vm109, %v105, 0
  %v126 = vsel %vm109, %v106, 0
  %v129 = vsel %vm109, %v107, 0
  %v132 = vsel %vm109, %v108, 0
  %134 = vmatprep.subr.bf16.mxu0 0
  %135 = vmatpush1.bf16.msra.mxu0 %v32
  %136 = vmatprep.subr.bf16.mxu0 0
  %137 = vmatpush1.bf16.msra.mxu0 %v33
  %138 = vmatprep.subr.bf16.mxu0 0
  %139 = vmatpush1.bf16.msra.mxu0 %v34
  %140 = vmatprep.subr.bf16.mxu0 0
  %141 = vmatpush1.bf16.msra.mxu0 %v35
  %142 = vmatprep.subr.bf16.mxu0 0
  %143 = vmatpush1.bf16.msra.mxu0 0
  %144 = vmatprep.subr.bf16.mxu0 0
  %145 = vmatpush1.bf16.msra.mxu0 0
  %146 = vmatprep.subr.bf16.mxu0 0
  %147 = vmatpush1.bf16.msra.mxu0 0
  %148 = vmatprep.subr.bf16.mxu0 0
  %149 = vmatpush1.bf16.msra.mxu0 0
  %150 = vmatprep.subr.bf16.mxu0 0
  %151 = vmatpush1.bf16.msra.mxu0 0
  %152 = vmatprep.subr.bf16.mxu0 0
  %153 = vmatpush1.bf16.msra.mxu0 0
  %154 = vmatprep.subr.bf16.mxu0 0
  %155 = vmatpush1.bf16.msra.mxu0 0
  %156 = vmatprep.subr.bf16.mxu0 0
  %157 = vmatpush1.bf16.msra.mxu0 0
  %158 = vmatprep.subr.bf16.mxu0 0
  %159 = vmatpush1.bf16.msra.mxu0 0
  %160 = vmatprep.subr.bf16.mxu0 0
  %161 = vmatpush1.bf16.msra.mxu0 0
  %162 = vmatprep.subr.bf16.mxu0 0
  %163 = vmatpush1.bf16.msra.mxu0 0
  %164 = vmatprep.subr.bf16.mxu0 0
  %165 = vmatpush1.bf16.msra.mxu0 0
  %166 = vmatprep.mubr.bf16.mxu0 0
  %167 = vmatmul.mubr.bf16.gmra.mrb[0].mxu0 %v111
  %v168 = vpop.f32.mrb[0].mxu0
  %v169 = vadd.f32 0.0, %v168
  %v170 = vpop.f32.mrb[0].mxu0
  %v171 = vpop.f32.mrb[0].mxu0
  %v172 = vadd.f32 0.0, %v171
  %v173 = vpop.f32.mrb[0].mxu0
  %174 = vmatprep.mubr.bf16.mxu0 0
  %175 = vmatmul.mubr.bf16.gmra.mrb[0].mxu0 %v114
  %v176 = vpop.f32.mrb[0].mxu0
  %v177 = vadd.f32 0.0, %v176
  %v178 = vpop.f32.mrb[0].mxu0
  %v179 = vpop.f32.mrb[0].mxu0
  %v180 = vadd.f32 0.0, %v179
  %v181 = vpop.f32.mrb[0].mxu0
  %182 = vmatprep.mubr.bf16.mxu0 0
  %183 = vmatmul.mubr.bf16.gmra.mrb[0].mxu0 %v117
  %v184 = vpop.f32.mrb[0].mxu0
  %v185 = vadd.f32 0.0, %v184
  %v186 = vpop.f32.mrb[0].mxu0
  %v187 = vpop.f32.mrb[0].mxu0
  %v188 = vadd.f32 0.0, %v187
  %v189 = vpop.f32.mrb[0].mxu0
  %190 = vmatprep.mubr.bf16.mxu0 0
  %191 = vmatmul.mubr.bf16.gmra.mrb[0].mxu0 %v120
  %v192 = vpop.f32.mrb[0].mxu0
  %v193 = vadd.f32 0.0, %v192
  %v194 = vpop.f32.mrb[0].mxu0
  %v195 = vpop.f32.mrb[0].mxu0
  %v196 = vadd.f32 0.0, %v195
  %v197 = vpop.f32.mrb[0].mxu0
  %198 = vmatprep.mubr.bf16.mxu0 0
  %199 = vmatmul.mubr.bf16.gmra.mrb[0].mxu0 %v123
  %v200 = vpop.f32.mrb[0].mxu0
  %v201 = vadd.f32 0.0, %v200
  %v202 = vpop.f32.mrb[0].mxu0
  %v203 = vpop.f32.mrb[0].mxu0
  %v204 = vadd.f32 0.0, %v203
  %v205 = vpop.f32.mrb[0].mxu0
  %206 = vmatprep.mubr.bf16.mxu0 0
  %207 = vmatmul.mubr.bf16.gmra.mrb[0].mxu0 %v126
  %v208 = vpop.f32.mrb[0].mxu0
  %v209 = vadd.f32 0.0, %v208
  %v210 = vpop.f32.mrb[0].mxu0
  %v211 = vpop.f32.mrb[0].mxu0
  %v212 = vadd.f32 0.0, %v211
  %v213 = vpop.f32.mrb[0].mxu0
  %214 = vmatprep.mubr.bf16.mxu0 0
  %215 = vmatmul.mubr.bf16.gmra.mrb[0].mxu0 %v129
  %v216 = vpop.f32.mrb[0].mxu0
  %v217 = vadd.f32 0.0, %v216
  %v218 = vpop.f32.mrb[0].mxu0
  %v219 = vpop.f32.mrb[0].mxu0
  %v220 = vadd.f32 0.0, %v219
  %v221 = vpop.f32.mrb[0].mxu0
  %222 = vmatprep.mubr.bf16.mxu0 0
  %223 = vmatmul.mubr.bf16.gmra.mrb[0].mxu0 %v132
  %v224 = vpop.f32.mrb[0].mxu0
  %v225 = vadd.f32 0.0, %v224
  %v226 = vpop.f32.mrb[0].mxu0
  %v227 = vpop.f32.mrb[0].mxu0
  %v228 = vadd.f32 0.0, %v227
  %v229 = vpop.f32.mrb[0].mxu0
  %230 = vdwg.mxu0
  %v231 = vsub.f32 %v24, %v169
  %v232 = vsub.f32 %v25, %v172
  %v233 = vsub.f32 %v26, %v177
  %v234 = vsub.f32 %v27, %v180
  %v235 = vsub.f32 %v28, %v185
  %v236 = vsub.f32 %v29, %v188
  %v237 = vsub.f32 %v30, %v193
  %v238 = vsub.f32 %v31, %v196
  %v239 = vsub.f32 %v24, %v201
  %v240 = vsub.f32 %v25, %v204
  %v241 = vsub.f32 %v26, %v209
  %v242 = vsub.f32 %v27, %v212
  %v243 = vsub.f32 %v28, %v217
  %v244 = vsub.f32 %v29, %v220
  %v245 = vsub.f32 %v30, %v225
  %v246 = vsub.f32 %v31, %v228
  %v247 = vmul.f32 %v231, 0.5
  %v248 = vmul.f32 %v232, 0.5
  %v249 = vmul.f32 %v233, 0.5
  %v250 = vmul.f32 %v234, 0.5
  %v251 = vmul.f32 %v235, 0.5
  %v252 = vmul.f32 %v236, 0.5
  %v253 = vmul.f32 %v237, 0.5
  %v254 = vmul.f32 %v238, 0.5
  %v255 = vmul.f32 %v239, 0.5
  %v256 = vmul.f32 %v240, 0.5
  %v257 = vmul.f32 %v241, 0.5
  %v258 = vmul.f32 %v242, 0.5
  %v259 = vmul.f32 %v243, 0.5
  %v260 = vmul.f32 %v244, 0.5
  %v261 = vmul.f32 %v245, 0.5
  %v262 = vmul.f32 %v246, 0.5
  %v263 = vadd.f32 %v247, %v255
  %v264 = vadd.f32 %v248, %v256
  %v265 = vadd.f32 %v249, %v257
  %v266 = vadd.f32 %v250, %v258
  %v267 = vadd.f32 %v251, %v259
  %v268 = vadd.f32 %v252, %v260
  %v269 = vadd.f32 %v253, %v261
  %v270 = vadd.f32 %v254, %v262
  %v271 = vmul.f32 %v263, %v263
  %v272 = vmul.f32 %v264, %v264
  %v273 = vmul.f32 %v265, %v265
  %v274 = vmul.f32 %v266, %v266
  %v275 = vmul.f32 %v267, %v267
  %v276 = vmul.f32 %v268, %v268
  %v277 = vmul.f32 %v269, %v269
  %v278 = vmul.f32 %v270, %v270
  %vm279 = vcmask 261120
  %v280 = vsel %vm279, %v271, 0.0
  %281 = vadd.xlane.f32.xlu0 %v280
  %v282 = vpop.xlane.xlu0 %281
  %v283 = vsel %vm279, %v272, 0.0
  %284 = vadd.xlane.f32.xlu0 %v283
  %v285 = vpop.xlane.xlu0 %284
  %v286 = vsel %vm279, %v273, 0.0
  %287 = vadd.xlane.f32.xlu0 %v286
  %v288 = vpop.xlane.xlu0 %287
  %v289 = vsel %vm279, %v274, 0.0
  %290 = vadd.xlane.f32.xlu0 %v289
  %v291 = vpop.xlane.xlu0 %290
  %v292 = vsel %vm279, %v275, 0.0
  %293 = vadd.xlane.f32.xlu0 %v292
  %v294 = vpop.xlane.xlu0 %293
  %v295 = vsel %vm279, %v276, 0.0
  %296 = vadd.xlane.f32.xlu0 %v295
  %v297 = vpop.xlane.xlu0 %296
  %v298 = vsel %vm279, %v277, 0.0
  %299 = vadd.xlane.f32.xlu0 %v298
  %v300 = vpop.xlane.xlu0 %299
  %v301 = vsel %vm279, %v278, 0.0
  %302 = vadd.xlane.f32.xlu0 %v301
  %v303 = vpop.xlane.xlu0 %302
  %v304 = vrsqrt.pop %v282
  %v305 = vmul.f32 %v282, %v304
  %vm306 = vcmp.eq.f32.partialorder %v282, inf
  %v307 = vsel %vm306, %v282, %v305
  %vm308 = vcmp.eq.f32.partialorder %v282, 0.0
  %v309 = vand.u32 %v282, 2147483648
  %v310 = vsel %vm308, %v309, %v307
  %v311 = vrsqrt.pop %v285
  %v312 = vmul.f32 %v285, %v311
  %vm313 = vcmp.eq.f32.partialorder %v285, inf
  %v314 = vsel %vm313, %v285, %v312
  %vm315 = vcmp.eq.f32.partialorder %v285, 0.0
  %v316 = vand.u32 %v285, 2147483648
  %v317 = vsel %vm315, %v316, %v314
  %v318 = vrsqrt.pop %v288
  %v319 = vmul.f32 %v288, %v318
  %vm320 = vcmp.eq.f32.partialorder %v288, inf
  %v321 = vsel %vm320, %v288, %v319
  %vm322 = vcmp.eq.f32.partialorder %v288, 0.0
  %v323 = vand.u32 %v288, 2147483648
  %v324 = vsel %vm322, %v323, %v321
  %v325 = vrsqrt.pop %v291
  %v326 = vmul.f32 %v291, %v325
  %vm327 = vcmp.eq.f32.partialorder %v291, inf
  %v328 = vsel %vm327, %v291, %v326
  %vm329 = vcmp.eq.f32.partialorder %v291, 0.0
  %v330 = vand.u32 %v291, 2147483648
  %v331 = vsel %vm329, %v330, %v328
  %v332 = vrsqrt.pop %v294
  %v333 = vmul.f32 %v294, %v332
  %vm334 = vcmp.eq.f32.partialorder %v294, inf
  %v335 = vsel %vm334, %v294, %v333
  %vm336 = vcmp.eq.f32.partialorder %v294, 0.0
  %v337 = vand.u32 %v294, 2147483648
  %v338 = vsel %vm336, %v337, %v335
  %v339 = vrsqrt.pop %v297
  %v340 = vmul.f32 %v297, %v339
  %vm341 = vcmp.eq.f32.partialorder %v297, inf
  %v342 = vsel %vm341, %v297, %v340
  %vm343 = vcmp.eq.f32.partialorder %v297, 0.0
  %v344 = vand.u32 %v297, 2147483648
  %v345 = vsel %vm343, %v344, %v342
  %v346 = vrsqrt.pop %v300
  %v347 = vmul.f32 %v300, %v346
  %vm348 = vcmp.eq.f32.partialorder %v300, inf
  %v349 = vsel %vm348, %v300, %v347
  %vm350 = vcmp.eq.f32.partialorder %v300, 0.0
  %v351 = vand.u32 %v300, 2147483648
  %v352 = vsel %vm350, %v351, %v349
  %v353 = vrsqrt.pop %v303
  %v354 = vmul.f32 %v303, %v353
  %vm355 = vcmp.eq.f32.partialorder %v303, inf
  %v356 = vsel %vm355, %v303, %v354
  %vm357 = vcmp.eq.f32.partialorder %v303, 0.0
  %v358 = vand.u32 %v303, 2147483648
  %v359 = vsel %vm357, %v358, %v356
  %v360 = vadd.f32 %v282, 1.0
  %v361 = vadd.f32 %v285, 1.0
  %v362 = vadd.f32 %v288, 1.0
  %v363 = vadd.f32 %v291, 1.0
  %v364 = vadd.f32 %v294, 1.0
  %v365 = vadd.f32 %v297, 1.0
  %v366 = vadd.f32 %v300, 1.0
  %v367 = vadd.f32 %v303, 1.0
  %v368 = vadd.f32 %v310, 1e-09
  %v369 = vadd.f32 %v317, 1e-09
  %v370 = vadd.f32 %v324, 1e-09
  %v371 = vadd.f32 %v331, 1e-09
  %v372 = vadd.f32 %v338, 1e-09
  %v373 = vadd.f32 %v345, 1e-09
  %v374 = vadd.f32 %v352, 1e-09
  %v375 = vadd.f32 %v359, 1e-09
  %v376 = vmul.f32 %v360, %v368
  %v377 = vmul.f32 %v361, %v369
  %v378 = vmul.f32 %v362, %v370
  %v379 = vmul.f32 %v363, %v371
  %v380 = vmul.f32 %v364, %v372
  %v381 = vmul.f32 %v365, %v373
  %v382 = vmul.f32 %v366, %v374
  %v383 = vmul.f32 %v367, %v375
  %v384 = vrcp.pop %v376
  %v385 = vmul.f32 %v282, %v384
  %v386 = vrcp.pop %v377
  %v387 = vmul.f32 %v285, %v386
  %v388 = vrcp.pop %v378
  %v389 = vmul.f32 %v288, %v388
  %v390 = vrcp.pop %v379
  %v391 = vmul.f32 %v291, %v390
  %v392 = vrcp.pop %v380
  %v393 = vmul.f32 %v294, %v392
  %v394 = vrcp.pop %v381
  %v395 = vmul.f32 %v297, %v394
  %v396 = vrcp.pop %v382
  %v397 = vmul.f32 %v300, %v396
  %v398 = vrcp.pop %v383
  %v399 = vmul.f32 %v303, %v398
  %v400 = vmul.f32 %v385, %v263
  %v401 = vmul.f32 %v387, %v264
  %v402 = vmul.f32 %v389, %v265
  %v403 = vmul.f32 %v391, %v266
  %v404 = vmul.f32 %v393, %v267
  %v405 = vmul.f32 %v395, %v268
  %v406 = vmul.f32 %v397, %v269
  %v407 = vmul.f32 %v399, %v270
  %v408 = vmul.f32 %v231, %v400
  %v409 = vmul.f32 %v232, %v401
  %v410 = vmul.f32 %v233, %v402
  %v411 = vmul.f32 %v234, %v403
  %v412 = vmul.f32 %v235, %v404
  %v413 = vmul.f32 %v236, %v405
  %v414 = vmul.f32 %v237, %v406
  %v415 = vmul.f32 %v238, %v407
  %v416 = vsel %vm279, %v408, 0.0
  %417 = vadd.xlane.f32.xlu0 %v416
  %v418 = vpop.xlane.xlu0 %417
  %v419 = vsel %vm279, %v409, 0.0
  %420 = vadd.xlane.f32.xlu0 %v419
  %v421 = vpop.xlane.xlu0 %420
  %v422 = vsel %vm279, %v410, 0.0
  %423 = vadd.xlane.f32.xlu0 %v422
  %v424 = vpop.xlane.xlu0 %423
  %v425 = vsel %vm279, %v411, 0.0
  %426 = vadd.xlane.f32.xlu0 %v425
  %v427 = vpop.xlane.xlu0 %426
  %v428 = vsel %vm279, %v412, 0.0
  %429 = vadd.xlane.f32.xlu0 %v428
  %v430 = vpop.xlane.xlu0 %429
  %v431 = vsel %vm279, %v413, 0.0
  %432 = vadd.xlane.f32.xlu0 %v431
  %v433 = vpop.xlane.xlu0 %432
  %v434 = vsel %vm279, %v414, 0.0
  %435 = vadd.xlane.f32.xlu0 %v434
  %v436 = vpop.xlane.xlu0 %435
  %v437 = vsel %vm279, %v415, 0.0
  %438 = vadd.xlane.f32.xlu0 %v437
  %v439 = vpop.xlane.xlu0 %438
  %v440 = vadd.f32 %v418, 0.0
  %v441 = vadd.f32 %v421, 0.0
  %v442 = vadd.f32 %v424, 0.0
  %v443 = vadd.f32 %v427, 0.0
  %v444 = vadd.f32 %v430, 0.0
  %v445 = vadd.f32 %v433, 0.0
  %v446 = vadd.f32 %v436, 0.0
  %v447 = vadd.f32 %v439, 0.0
  %v448 = vmul.f32 %v239, %v400
  %v449 = vmul.f32 %v240, %v401
  %v450 = vmul.f32 %v241, %v402
  %v451 = vmul.f32 %v242, %v403
  %v452 = vmul.f32 %v243, %v404
  %v453 = vmul.f32 %v244, %v405
  %v454 = vmul.f32 %v245, %v406
  %v455 = vmul.f32 %v246, %v407
  %v456 = vsel %vm279, %v448, 0.0
  %457 = vadd.xlane.f32.xlu0 %v456
  %v458 = vpop.xlane.xlu0 %457
  %v459 = vsel %vm279, %v449, 0.0
  %460 = vadd.xlane.f32.xlu0 %v459
  %v461 = vpop.xlane.xlu0 %460
  %v462 = vsel %vm279, %v450, 0.0
  %463 = vadd.xlane.f32.xlu0 %v462
  %v464 = vpop.xlane.xlu0 %463
  %v465 = vsel %vm279, %v451, 0.0
  %466 = vadd.xlane.f32.xlu0 %v465
  %v467 = vpop.xlane.xlu0 %466
  %v468 = vsel %vm279, %v452, 0.0
  %469 = vadd.xlane.f32.xlu0 %v468
  %v470 = vpop.xlane.xlu0 %469
  %v471 = vsel %vm279, %v453, 0.0
  %472 = vadd.xlane.f32.xlu0 %v471
  %v473 = vpop.xlane.xlu0 %472
  %v474 = vsel %vm279, %v454, 0.0
  %475 = vadd.xlane.f32.xlu0 %v474
  %v476 = vpop.xlane.xlu0 %475
  %v477 = vsel %vm279, %v455, 0.0
  %478 = vadd.xlane.f32.xlu0 %v477
  %v479 = vpop.xlane.xlu0 %478
  %v480 = vadd.f32 %v458, 0.0
  %v481 = vadd.f32 %v461, 0.0
  %v482 = vadd.f32 %v464, 0.0
  %v483 = vadd.f32 %v467, 0.0
  %v484 = vadd.f32 %v470, 0.0
  %v485 = vadd.f32 %v473, 0.0
  %v486 = vadd.f32 %v476, 0.0
  %v487 = vadd.f32 %v479, 0.0
  %v488 = vsub.f32 %v440, %v480
  %v489 = vsub.f32 %v441, %v481
  %v490 = vsub.f32 %v442, %v482
  %v491 = vsub.f32 %v443, %v483
  %v492 = vsub.f32 %v444, %v484
  %v493 = vsub.f32 %v445, %v485
  %v494 = vsub.f32 %v446, %v486
  %v495 = vsub.f32 %v447, %v487
  %v496 = vxor.u32 %v488, 2147483648
  %v497 = vxor.u32 %v489, 2147483648
  %v498 = vxor.u32 %v490, 2147483648
  %v499 = vxor.u32 %v491, 2147483648
  %v500 = vxor.u32 %v492, 2147483648
  %v501 = vxor.u32 %v493, 2147483648
  %v502 = vxor.u32 %v494, 2147483648
  %v503 = vxor.u32 %v495, 2147483648
  %v504 = vmul.f32 %v496, 1.442695
  %v505 = vpow.pop %v504
  %v506 = vmul.f32 %v497, 1.442695
  %v507 = vpow.pop %v506
  %v508 = vmul.f32 %v498, 1.442695
  %v509 = vpow.pop %v508
  %v510 = vmul.f32 %v499, 1.442695
  %v511 = vpow.pop %v510
  %v512 = vmul.f32 %v500, 1.442695
  %v513 = vpow.pop %v512
  %v514 = vmul.f32 %v501, 1.442695
  %v515 = vpow.pop %v514
  %v516 = vmul.f32 %v502, 1.442695
  %v517 = vpow.pop %v516
  %v518 = vmul.f32 %v503, 1.442695
  %v519 = vpow.pop %v518
  %v520 = vadd.f32 %v505, 1.0
  %v521 = vadd.f32 %v507, 1.0
  %v522 = vadd.f32 %v509, 1.0
  %v523 = vadd.f32 %v511, 1.0
  %v524 = vadd.f32 %v513, 1.0
  %v525 = vadd.f32 %v515, 1.0
  %v526 = vadd.f32 %v517, 1.0
  %v527 = vadd.f32 %v519, 1.0
  %v528 = vrcp.pop %v520
  %v529 = vmul.f32 1.0, %v528
  %v530 = vrcp.pop %v521
  %v531 = vmul.f32 1.0, %v530
  %v532 = vrcp.pop %v522
  %v533 = vmul.f32 1.0, %v532
  %v534 = vrcp.pop %v523
  %v535 = vmul.f32 1.0, %v534
  %v536 = vrcp.pop %v524
  %v537 = vmul.f32 1.0, %v536
  %v538 = vrcp.pop %v525
  %v539 = vmul.f32 1.0, %v538
  %v540 = vrcp.pop %v526
  %v541 = vmul.f32 1.0, %v540
  %v542 = vrcp.pop %v527
  %v543 = vmul.f32 1.0, %v542
  %v544 = vmul.f32 %v529, %v231
  %v545 = vmul.f32 %v531, %v232
  %v546 = vmul.f32 %v533, %v233
  %v547 = vmul.f32 %v535, %v234
  %v548 = vmul.f32 %v537, %v235
  %v549 = vmul.f32 %v539, %v236
  %v550 = vmul.f32 %v541, %v237
  %v551 = vmul.f32 %v543, %v238
  %v552 = vsub.f32 1.0, %v529
  %v553 = vsub.f32 1.0, %v531
  %v554 = vsub.f32 1.0, %v533
  %v555 = vsub.f32 1.0, %v535
  %v556 = vsub.f32 1.0, %v537
  %v557 = vsub.f32 1.0, %v539
  %v558 = vsub.f32 1.0, %v541
  %v559 = vsub.f32 1.0, %v543
  %v560 = vmul.f32 %v552, %v239
  %v561 = vmul.f32 %v553, %v240
  %v562 = vmul.f32 %v554, %v241
  %v563 = vmul.f32 %v555, %v242
  %v564 = vmul.f32 %v556, %v243
  %v565 = vmul.f32 %v557, %v244
  %v566 = vmul.f32 %v558, %v245
  %v567 = vmul.f32 %v559, %v246
  %v568 = vadd.f32 %v544, %v560
  %v569 = vadd.f32 %v545, %v561
  %v570 = vadd.f32 %v546, %v562
  %v571 = vadd.f32 %v547, %v563
  %v572 = vadd.f32 %v548, %v564
  %v573 = vadd.f32 %v549, %v565
  %v574 = vadd.f32 %v550, %v566
  %v575 = vadd.f32 %v551, %v567
  %v576 = vmul.f32 %v568, %v568
  %v577 = vmul.f32 %v569, %v569
  %v578 = vmul.f32 %v570, %v570
  %v579 = vmul.f32 %v571, %v571
  %v580 = vmul.f32 %v572, %v572
  %v581 = vmul.f32 %v573, %v573
  %v582 = vmul.f32 %v574, %v574
  %v583 = vmul.f32 %v575, %v575
  %v584 = vsel %vm279, %v576, 0.0
  %585 = vadd.xlane.f32.xlu0 %v584
  %v586 = vpop.xlane.xlu0 %585
  %v587 = vsel %vm279, %v577, 0.0
  %588 = vadd.xlane.f32.xlu0 %v587
  %v589 = vpop.xlane.xlu0 %588
  %v590 = vsel %vm279, %v578, 0.0
  %591 = vadd.xlane.f32.xlu0 %v590
  %v592 = vpop.xlane.xlu0 %591
  %v593 = vsel %vm279, %v579, 0.0
  %594 = vadd.xlane.f32.xlu0 %v593
  %v595 = vpop.xlane.xlu0 %594
  %v596 = vsel %vm279, %v580, 0.0
  %597 = vadd.xlane.f32.xlu0 %v596
  %v598 = vpop.xlane.xlu0 %597
  %v599 = vsel %vm279, %v581, 0.0
  %600 = vadd.xlane.f32.xlu0 %v599
  %v601 = vpop.xlane.xlu0 %600
  %v602 = vsel %vm279, %v582, 0.0
  %603 = vadd.xlane.f32.xlu0 %v602
  %v604 = vpop.xlane.xlu0 %603
  %v605 = vsel %vm279, %v583, 0.0
  %606 = vadd.xlane.f32.xlu0 %v605
  %v607 = vpop.xlane.xlu0 %606
  %v608 = vrsqrt.pop %v586
  %v609 = vmul.f32 %v586, %v608
  %vm610 = vcmp.eq.f32.partialorder %v586, inf
  %v611 = vsel %vm610, %v586, %v609
  %vm612 = vcmp.eq.f32.partialorder %v586, 0.0
  %v613 = vand.u32 %v586, 2147483648
  %v614 = vsel %vm612, %v613, %v611
  %v615 = vrsqrt.pop %v589
  %v616 = vmul.f32 %v589, %v615
  %vm617 = vcmp.eq.f32.partialorder %v589, inf
  %v618 = vsel %vm617, %v589, %v616
  %vm619 = vcmp.eq.f32.partialorder %v589, 0.0
  %v620 = vand.u32 %v589, 2147483648
  %v621 = vsel %vm619, %v620, %v618
  %v622 = vrsqrt.pop %v592
  %v623 = vmul.f32 %v592, %v622
  %vm624 = vcmp.eq.f32.partialorder %v592, inf
  %v625 = vsel %vm624, %v592, %v623
  %vm626 = vcmp.eq.f32.partialorder %v592, 0.0
  %v627 = vand.u32 %v592, 2147483648
  %v628 = vsel %vm626, %v627, %v625
  %v629 = vrsqrt.pop %v595
  %v630 = vmul.f32 %v595, %v629
  %vm631 = vcmp.eq.f32.partialorder %v595, inf
  %v632 = vsel %vm631, %v595, %v630
  %vm633 = vcmp.eq.f32.partialorder %v595, 0.0
  %v634 = vand.u32 %v595, 2147483648
  %v635 = vsel %vm633, %v634, %v632
  %v636 = vrsqrt.pop %v598
  %v637 = vmul.f32 %v598, %v636
  %vm638 = vcmp.eq.f32.partialorder %v598, inf
  %v639 = vsel %vm638, %v598, %v637
  %vm640 = vcmp.eq.f32.partialorder %v598, 0.0
  %v641 = vand.u32 %v598, 2147483648
  %v642 = vsel %vm640, %v641, %v639
  %v643 = vrsqrt.pop %v601
  %v644 = vmul.f32 %v601, %v643
  %vm645 = vcmp.eq.f32.partialorder %v601, inf
  %v646 = vsel %vm645, %v601, %v644
  %vm647 = vcmp.eq.f32.partialorder %v601, 0.0
  %v648 = vand.u32 %v601, 2147483648
  %v649 = vsel %vm647, %v648, %v646
  %v650 = vrsqrt.pop %v604
  %v651 = vmul.f32 %v604, %v650
  %vm652 = vcmp.eq.f32.partialorder %v604, inf
  %v653 = vsel %vm652, %v604, %v651
  %vm654 = vcmp.eq.f32.partialorder %v604, 0.0
  %v655 = vand.u32 %v604, 2147483648
  %v656 = vsel %vm654, %v655, %v653
  %v657 = vrsqrt.pop %v607
  %v658 = vmul.f32 %v607, %v657
  %vm659 = vcmp.eq.f32.partialorder %v607, inf
  %v660 = vsel %vm659, %v607, %v658
  %vm661 = vcmp.eq.f32.partialorder %v607, 0.0
  %v662 = vand.u32 %v607, 2147483648
  %v663 = vsel %vm661, %v662, %v660
  %v664 = vadd.f32 %v586, 1.0
  %v665 = vadd.f32 %v589, 1.0
  %v666 = vadd.f32 %v592, 1.0
  %v667 = vadd.f32 %v595, 1.0
  %v668 = vadd.f32 %v598, 1.0
  %v669 = vadd.f32 %v601, 1.0
  %v670 = vadd.f32 %v604, 1.0
  %v671 = vadd.f32 %v607, 1.0
  %v672 = vadd.f32 %v614, 1e-09
  %v673 = vadd.f32 %v621, 1e-09
  %v674 = vadd.f32 %v628, 1e-09
  %v675 = vadd.f32 %v635, 1e-09
  %v676 = vadd.f32 %v642, 1e-09
  %v677 = vadd.f32 %v649, 1e-09
  %v678 = vadd.f32 %v656, 1e-09
  %v679 = vadd.f32 %v663, 1e-09
  %v680 = vmul.f32 %v664, %v672
  %v681 = vmul.f32 %v665, %v673
  %v682 = vmul.f32 %v666, %v674
  %v683 = vmul.f32 %v667, %v675
  %v684 = vmul.f32 %v668, %v676
  %v685 = vmul.f32 %v669, %v677
  %v686 = vmul.f32 %v670, %v678
  %v687 = vmul.f32 %v671, %v679
  %v688 = vrcp.pop %v680
  %v689 = vmul.f32 %v586, %v688
  %v690 = vrcp.pop %v681
  %v691 = vmul.f32 %v589, %v690
  %v692 = vrcp.pop %v682
  %v693 = vmul.f32 %v592, %v692
  %v694 = vrcp.pop %v683
  %v695 = vmul.f32 %v595, %v694
  %v696 = vrcp.pop %v684
  %v697 = vmul.f32 %v598, %v696
  %v698 = vrcp.pop %v685
  %v699 = vmul.f32 %v601, %v698
  %v700 = vrcp.pop %v686
  %v701 = vmul.f32 %v604, %v700
  %v702 = vrcp.pop %v687
  %v703 = vmul.f32 %v607, %v702
  %v704 = vmul.f32 %v689, %v568
  %v705 = vmul.f32 %v691, %v569
  %v706 = vmul.f32 %v693, %v570
  %v707 = vmul.f32 %v695, %v571
  %v708 = vmul.f32 %v697, %v572
  %v709 = vmul.f32 %v699, %v573
  %v710 = vmul.f32 %v701, %v574
  %v711 = vmul.f32 %v703, %v575
  %v712 = vmul.f32 %v231, %v704
  %v713 = vmul.f32 %v232, %v705
  %v714 = vmul.f32 %v233, %v706
  %v715 = vmul.f32 %v234, %v707
  %v716 = vmul.f32 %v235, %v708
  %v717 = vmul.f32 %v236, %v709
  %v718 = vmul.f32 %v237, %v710
  %v719 = vmul.f32 %v238, %v711
  %v720 = vsel %vm279, %v712, 0.0
  %721 = vadd.xlane.f32.xlu0 %v720
  %v722 = vpop.xlane.xlu0 %721
  %v723 = vsel %vm279, %v713, 0.0
  %724 = vadd.xlane.f32.xlu0 %v723
  %v725 = vpop.xlane.xlu0 %724
  %v726 = vsel %vm279, %v714, 0.0
  %727 = vadd.xlane.f32.xlu0 %v726
  %v728 = vpop.xlane.xlu0 %727
  %v729 = vsel %vm279, %v715, 0.0
  %730 = vadd.xlane.f32.xlu0 %v729
  %v731 = vpop.xlane.xlu0 %730
  %v732 = vsel %vm279, %v716, 0.0
  %733 = vadd.xlane.f32.xlu0 %v732
  %v734 = vpop.xlane.xlu0 %733
  %v735 = vsel %vm279, %v717, 0.0
  %736 = vadd.xlane.f32.xlu0 %v735
  %v737 = vpop.xlane.xlu0 %736
  %v738 = vsel %vm279, %v718, 0.0
  %739 = vadd.xlane.f32.xlu0 %v738
  %v740 = vpop.xlane.xlu0 %739
  %v741 = vsel %vm279, %v719, 0.0
  %742 = vadd.xlane.f32.xlu0 %v741
  %v743 = vpop.xlane.xlu0 %742
  %v744 = vadd.f32 %v440, %v722
  %v745 = vadd.f32 %v441, %v725
  %v746 = vadd.f32 %v442, %v728
  %v747 = vadd.f32 %v443, %v731
  %v748 = vadd.f32 %v444, %v734
  %v749 = vadd.f32 %v445, %v737
  %v750 = vadd.f32 %v446, %v740
  %v751 = vadd.f32 %v447, %v743
  %v752 = vmul.f32 %v239, %v704
  %v753 = vmul.f32 %v240, %v705
  %v754 = vmul.f32 %v241, %v706
  %v755 = vmul.f32 %v242, %v707
  %v756 = vmul.f32 %v243, %v708
  %v757 = vmul.f32 %v244, %v709
  %v758 = vmul.f32 %v245, %v710
  %v759 = vmul.f32 %v246, %v711
  %v760 = vsel %vm279, %v752, 0.0
  %761 = vadd.xlane.f32.xlu0 %v760
  %v762 = vpop.xlane.xlu0 %761
  %v763 = vsel %vm279, %v753, 0.0
  %764 = vadd.xlane.f32.xlu0 %v763
  %v765 = vpop.xlane.xlu0 %764
  %v766 = vsel %vm279, %v754, 0.0
  %767 = vadd.xlane.f32.xlu0 %v766
  %v768 = vpop.xlane.xlu0 %767
  %v769 = vsel %vm279, %v755, 0.0
  %770 = vadd.xlane.f32.xlu0 %v769
  %v771 = vpop.xlane.xlu0 %770
  %v772 = vsel %vm279, %v756, 0.0
  %773 = vadd.xlane.f32.xlu0 %v772
  %v774 = vpop.xlane.xlu0 %773
  %v775 = vsel %vm279, %v757, 0.0
  %776 = vadd.xlane.f32.xlu0 %v775
  %v777 = vpop.xlane.xlu0 %776
  %v778 = vsel %vm279, %v758, 0.0
  %779 = vadd.xlane.f32.xlu0 %v778
  %v780 = vpop.xlane.xlu0 %779
  %v781 = vsel %vm279, %v759, 0.0
  %782 = vadd.xlane.f32.xlu0 %v781
  %v783 = vpop.xlane.xlu0 %782
  %v784 = vadd.f32 %v480, %v762
  %v785 = vadd.f32 %v481, %v765
  %v786 = vadd.f32 %v482, %v768
  %v787 = vadd.f32 %v483, %v771
  %v788 = vadd.f32 %v484, %v774
  %v789 = vadd.f32 %v485, %v777
  %v790 = vadd.f32 %v486, %v780
  %v791 = vadd.f32 %v487, %v783
  %v792 = vsub.f32 %v744, %v784
  %v793 = vsub.f32 %v745, %v785
  %v794 = vsub.f32 %v746, %v786
  %v795 = vsub.f32 %v747, %v787
  %v796 = vsub.f32 %v748, %v788
  %v797 = vsub.f32 %v749, %v789
  %v798 = vsub.f32 %v750, %v790
  %v799 = vsub.f32 %v751, %v791
  %v800 = vxor.u32 %v792, 2147483648
  %v801 = vxor.u32 %v793, 2147483648
  %v802 = vxor.u32 %v794, 2147483648
  %v803 = vxor.u32 %v795, 2147483648
  %v804 = vxor.u32 %v796, 2147483648
  %v805 = vxor.u32 %v797, 2147483648
  %v806 = vxor.u32 %v798, 2147483648
  %v807 = vxor.u32 %v799, 2147483648
  %v808 = vmul.f32 %v800, 1.442695
  %v809 = vpow.pop %v808
  %v810 = vmul.f32 %v801, 1.442695
  %v811 = vpow.pop %v810
  %v812 = vmul.f32 %v802, 1.442695
  %v813 = vpow.pop %v812
  %v814 = vmul.f32 %v803, 1.442695
  %v815 = vpow.pop %v814
  %v816 = vmul.f32 %v804, 1.442695
  %v817 = vpow.pop %v816
  %v818 = vmul.f32 %v805, 1.442695
  %v819 = vpow.pop %v818
  %v820 = vmul.f32 %v806, 1.442695
  %v821 = vpow.pop %v820
  %v822 = vmul.f32 %v807, 1.442695
  %v823 = vpow.pop %v822
  %v824 = vadd.f32 %v809, 1.0
  %v825 = vadd.f32 %v811, 1.0
  %v826 = vadd.f32 %v813, 1.0
  %v827 = vadd.f32 %v815, 1.0
  %v828 = vadd.f32 %v817, 1.0
  %v829 = vadd.f32 %v819, 1.0
  %v830 = vadd.f32 %v821, 1.0
  %v831 = vadd.f32 %v823, 1.0
  %v832 = vrcp.pop %v824
  %v833 = vmul.f32 1.0, %v832
  %v834 = vrcp.pop %v825
  %v835 = vmul.f32 1.0, %v834
  %v836 = vrcp.pop %v826
  %v837 = vmul.f32 1.0, %v836
  %v838 = vrcp.pop %v827
  %v839 = vmul.f32 1.0, %v838
  %v840 = vrcp.pop %v828
  %v841 = vmul.f32 1.0, %v840
  %v842 = vrcp.pop %v829
  %v843 = vmul.f32 1.0, %v842
  %v844 = vrcp.pop %v830
  %v845 = vmul.f32 1.0, %v844
  %v846 = vrcp.pop %v831
  %v847 = vmul.f32 1.0, %v846
  %v848 = vmul.f32 %v833, %v231
  %v849 = vmul.f32 %v835, %v232
  %v850 = vmul.f32 %v837, %v233
  %v851 = vmul.f32 %v839, %v234
  %v852 = vmul.f32 %v841, %v235
  %v853 = vmul.f32 %v843, %v236
  %v854 = vmul.f32 %v845, %v237
  %v855 = vmul.f32 %v847, %v238
  %v856 = vsub.f32 1.0, %v833
  %v857 = vsub.f32 1.0, %v835
  %v858 = vsub.f32 1.0, %v837
  %v859 = vsub.f32 1.0, %v839
  %v860 = vsub.f32 1.0, %v841
  %v861 = vsub.f32 1.0, %v843
  %v862 = vsub.f32 1.0, %v845
  %v863 = vsub.f32 1.0, %v847
  %v864 = vmul.f32 %v856, %v239
  %v865 = vmul.f32 %v857, %v240
  %v866 = vmul.f32 %v858, %v241
  %v867 = vmul.f32 %v859, %v242
  %v868 = vmul.f32 %v860, %v243
  %v869 = vmul.f32 %v861, %v244
  %v870 = vmul.f32 %v862, %v245
  %v871 = vmul.f32 %v863, %v246
  %v872 = vadd.f32 %v848, %v864
  %v873 = vadd.f32 %v849, %v865
  %v874 = vadd.f32 %v850, %v866
  %v875 = vadd.f32 %v851, %v867
  %v876 = vadd.f32 %v852, %v868
  %v877 = vadd.f32 %v853, %v869
  %v878 = vadd.f32 %v854, %v870
  %v879 = vadd.f32 %v855, %v871
  %v880 = vmul.f32 %v872, %v872
  %v881 = vmul.f32 %v873, %v873
  %v882 = vmul.f32 %v874, %v874
  %v883 = vmul.f32 %v875, %v875
  %v884 = vmul.f32 %v876, %v876
  %v885 = vmul.f32 %v877, %v877
  %v886 = vmul.f32 %v878, %v878
  %v887 = vmul.f32 %v879, %v879
  %v888 = vsel %vm279, %v880, 0.0
  %889 = vadd.xlane.f32.xlu0 %v888
  %v890 = vpop.xlane.xlu0 %889
  %v891 = vsel %vm279, %v881, 0.0
  %892 = vadd.xlane.f32.xlu0 %v891
  %v893 = vpop.xlane.xlu0 %892
  %v894 = vsel %vm279, %v882, 0.0
  %895 = vadd.xlane.f32.xlu0 %v894
  %v896 = vpop.xlane.xlu0 %895
  %v897 = vsel %vm279, %v883, 0.0
  %898 = vadd.xlane.f32.xlu0 %v897
  %v899 = vpop.xlane.xlu0 %898
  %v900 = vsel %vm279, %v884, 0.0
  %901 = vadd.xlane.f32.xlu0 %v900
  %v902 = vpop.xlane.xlu0 %901
  %v903 = vsel %vm279, %v885, 0.0
  %904 = vadd.xlane.f32.xlu0 %v903
  %v905 = vpop.xlane.xlu0 %904
  %v906 = vsel %vm279, %v886, 0.0
  %907 = vadd.xlane.f32.xlu0 %v906
  %v908 = vpop.xlane.xlu0 %907
  %v909 = vsel %vm279, %v887, 0.0
  %910 = vadd.xlane.f32.xlu0 %v909
  %v911 = vpop.xlane.xlu0 %910
  %v912 = vrsqrt.pop %v890
  %v913 = vmul.f32 %v890, %v912
  %vm914 = vcmp.eq.f32.partialorder %v890, inf
  %v915 = vsel %vm914, %v890, %v913
  %vm916 = vcmp.eq.f32.partialorder %v890, 0.0
  %v917 = vand.u32 %v890, 2147483648
  %v918 = vsel %vm916, %v917, %v915
  %v919 = vrsqrt.pop %v893
  %v920 = vmul.f32 %v893, %v919
  %vm921 = vcmp.eq.f32.partialorder %v893, inf
  %v922 = vsel %vm921, %v893, %v920
  %vm923 = vcmp.eq.f32.partialorder %v893, 0.0
  %v924 = vand.u32 %v893, 2147483648
  %v925 = vsel %vm923, %v924, %v922
  %v926 = vrsqrt.pop %v896
  %v927 = vmul.f32 %v896, %v926
  %vm928 = vcmp.eq.f32.partialorder %v896, inf
  %v929 = vsel %vm928, %v896, %v927
  %vm930 = vcmp.eq.f32.partialorder %v896, 0.0
  %v931 = vand.u32 %v896, 2147483648
  %v932 = vsel %vm930, %v931, %v929
  %v933 = vrsqrt.pop %v899
  %v934 = vmul.f32 %v899, %v933
  %vm935 = vcmp.eq.f32.partialorder %v899, inf
  %v936 = vsel %vm935, %v899, %v934
  %vm937 = vcmp.eq.f32.partialorder %v899, 0.0
  %v938 = vand.u32 %v899, 2147483648
  %v939 = vsel %vm937, %v938, %v936
  %v940 = vrsqrt.pop %v902
  %v941 = vmul.f32 %v902, %v940
  %vm942 = vcmp.eq.f32.partialorder %v902, inf
  %v943 = vsel %vm942, %v902, %v941
  %vm944 = vcmp.eq.f32.partialorder %v902, 0.0
  %v945 = vand.u32 %v902, 2147483648
  %v946 = vsel %vm944, %v945, %v943
  %v947 = vrsqrt.pop %v905
  %v948 = vmul.f32 %v905, %v947
  %vm949 = vcmp.eq.f32.partialorder %v905, inf
  %v950 = vsel %vm949, %v905, %v948
  %vm951 = vcmp.eq.f32.partialorder %v905, 0.0
  %v952 = vand.u32 %v905, 2147483648
  %v953 = vsel %vm951, %v952, %v950
  %v954 = vrsqrt.pop %v908
  %v955 = vmul.f32 %v908, %v954
  %vm956 = vcmp.eq.f32.partialorder %v908, inf
  %v957 = vsel %vm956, %v908, %v955
  %vm958 = vcmp.eq.f32.partialorder %v908, 0.0
  %v959 = vand.u32 %v908, 2147483648
  %v960 = vsel %vm958, %v959, %v957
  %v961 = vrsqrt.pop %v911
  %v962 = vmul.f32 %v911, %v961
  %vm963 = vcmp.eq.f32.partialorder %v911, inf
  %v964 = vsel %vm963, %v911, %v962
  %vm965 = vcmp.eq.f32.partialorder %v911, 0.0
  %v966 = vand.u32 %v911, 2147483648
  %v967 = vsel %vm965, %v966, %v964
  %v968 = vadd.f32 %v890, 1.0
  %v969 = vadd.f32 %v893, 1.0
  %v970 = vadd.f32 %v896, 1.0
  %v971 = vadd.f32 %v899, 1.0
  %v972 = vadd.f32 %v902, 1.0
  %v973 = vadd.f32 %v905, 1.0
  %v974 = vadd.f32 %v908, 1.0
  %v975 = vadd.f32 %v911, 1.0
  %v976 = vadd.f32 %v918, 1e-09
  %v977 = vadd.f32 %v925, 1e-09
  %v978 = vadd.f32 %v932, 1e-09
  %v979 = vadd.f32 %v939, 1e-09
  %v980 = vadd.f32 %v946, 1e-09
  %v981 = vadd.f32 %v953, 1e-09
  %v982 = vadd.f32 %v960, 1e-09
  %v983 = vadd.f32 %v967, 1e-09
  %v984 = vmul.f32 %v968, %v976
  %v985 = vmul.f32 %v969, %v977
  %v986 = vmul.f32 %v970, %v978
  %v987 = vmul.f32 %v971, %v979
  %v988 = vmul.f32 %v972, %v980
  %v989 = vmul.f32 %v973, %v981
  %v990 = vmul.f32 %v974, %v982
  %v991 = vmul.f32 %v975, %v983
  %v992 = vrcp.pop %v984
  %v993 = vmul.f32 %v890, %v992
  %v994 = vrcp.pop %v985
  %v995 = vmul.f32 %v893, %v994
  %v996 = vrcp.pop %v986
  %v997 = vmul.f32 %v896, %v996
  %v998 = vrcp.pop %v987
  %v999 = vmul.f32 %v899, %v998
  %v1000 = vrcp.pop %v988
  %v1001 = vmul.f32 %v902, %v1000
  %v1002 = vrcp.pop %v989
  %v1003 = vmul.f32 %v905, %v1002
  %v1004 = vrcp.pop %v990
  %v1005 = vmul.f32 %v908, %v1004
  %v1006 = vrcp.pop %v991
  %v1007 = vmul.f32 %v911, %v1006
  %v1008 = vmul.f32 %v993, %v872
  %v1009 = vmul.f32 %v995, %v873
  %v1010 = vmul.f32 %v997, %v874
  %v1011 = vmul.f32 %v999, %v875
  %v1012 = vmul.f32 %v1001, %v876
  %v1013 = vmul.f32 %v1003, %v877
  %v1014 = vmul.f32 %v1005, %v878
  %v1015 = vmul.f32 %v1007, %v879
  %v1016 = vmul.f32 %v169, 0.5
  %v1017 = vmul.f32 %v172, 0.5
  %v1018 = vmul.f32 %v177, 0.5
  %v1019 = vmul.f32 %v180, 0.5
  %v1020 = vmul.f32 %v185, 0.5
  %v1021 = vmul.f32 %v188, 0.5
  %v1022 = vmul.f32 %v193, 0.5
  %v1023 = vmul.f32 %v196, 0.5
  %v1024 = vmul.f32 %v201, 0.5
  %v1025 = vmul.f32 %v204, 0.5
  %v1026 = vmul.f32 %v209, 0.5
  %v1027 = vmul.f32 %v212, 0.5
  %v1028 = vmul.f32 %v217, 0.5
  %v1029 = vmul.f32 %v220, 0.5
  %v1030 = vmul.f32 %v225, 0.5
  %v1031 = vmul.f32 %v228, 0.5
  %v1032 = vadd.f32 %v1016, %v1024
  %v1033 = vadd.f32 %v1017, %v1025
  %v1034 = vadd.f32 %v1018, %v1026
  %v1035 = vadd.f32 %v1019, %v1027
  %v1036 = vadd.f32 %v1020, %v1028
  %v1037 = vadd.f32 %v1021, %v1029
  %v1038 = vadd.f32 %v1022, %v1030
  %v1039 = vadd.f32 %v1023, %v1031
  %v1040 = vmul.f32 %v1032, %v1032
  %v1041 = vmul.f32 %v1033, %v1033
  %v1042 = vmul.f32 %v1034, %v1034
  %v1043 = vmul.f32 %v1035, %v1035
  %v1044 = vmul.f32 %v1036, %v1036
  %v1045 = vmul.f32 %v1037, %v1037
  %v1046 = vmul.f32 %v1038, %v1038
  %v1047 = vmul.f32 %v1039, %v1039
  %v1048 = vsel %vm279, %v1040, 0.0
  %1049 = vadd.xlane.f32.xlu0 %v1048
  %v1050 = vpop.xlane.xlu0 %1049
  %v1051 = vsel %vm279, %v1041, 0.0
  %1052 = vadd.xlane.f32.xlu0 %v1051
  %v1053 = vpop.xlane.xlu0 %1052
  %v1054 = vsel %vm279, %v1042, 0.0
  %1055 = vadd.xlane.f32.xlu0 %v1054
  %v1056 = vpop.xlane.xlu0 %1055
  %v1057 = vsel %vm279, %v1043, 0.0
  %1058 = vadd.xlane.f32.xlu0 %v1057
  %v1059 = vpop.xlane.xlu0 %1058
  %v1060 = vsel %vm279, %v1044, 0.0
  %1061 = vadd.xlane.f32.xlu0 %v1060
  %v1062 = vpop.xlane.xlu0 %1061
  %v1063 = vsel %vm279, %v1045, 0.0
  %1064 = vadd.xlane.f32.xlu0 %v1063
  %v1065 = vpop.xlane.xlu0 %1064
  %v1066 = vsel %vm279, %v1046, 0.0
  %1067 = vadd.xlane.f32.xlu0 %v1066
  %v1068 = vpop.xlane.xlu0 %1067
  %v1069 = vsel %vm279, %v1047, 0.0
  %1070 = vadd.xlane.f32.xlu0 %v1069
  %v1071 = vpop.xlane.xlu0 %1070
  %v1072 = vrsqrt.pop %v1050
  %v1073 = vmul.f32 %v1050, %v1072
  %vm1074 = vcmp.eq.f32.partialorder %v1050, inf
  %v1075 = vsel %vm1074, %v1050, %v1073
  %vm1076 = vcmp.eq.f32.partialorder %v1050, 0.0
  %v1077 = vand.u32 %v1050, 2147483648
  %v1078 = vsel %vm1076, %v1077, %v1075
  %v1079 = vrsqrt.pop %v1053
  %v1080 = vmul.f32 %v1053, %v1079
  %vm1081 = vcmp.eq.f32.partialorder %v1053, inf
  %v1082 = vsel %vm1081, %v1053, %v1080
  %vm1083 = vcmp.eq.f32.partialorder %v1053, 0.0
  %v1084 = vand.u32 %v1053, 2147483648
  %v1085 = vsel %vm1083, %v1084, %v1082
  %v1086 = vrsqrt.pop %v1056
  %v1087 = vmul.f32 %v1056, %v1086
  %vm1088 = vcmp.eq.f32.partialorder %v1056, inf
  %v1089 = vsel %vm1088, %v1056, %v1087
  %vm1090 = vcmp.eq.f32.partialorder %v1056, 0.0
  %v1091 = vand.u32 %v1056, 2147483648
  %v1092 = vsel %vm1090, %v1091, %v1089
  %v1093 = vrsqrt.pop %v1059
  %v1094 = vmul.f32 %v1059, %v1093
  %vm1095 = vcmp.eq.f32.partialorder %v1059, inf
  %v1096 = vsel %vm1095, %v1059, %v1094
  %vm1097 = vcmp.eq.f32.partialorder %v1059, 0.0
  %v1098 = vand.u32 %v1059, 2147483648
  %v1099 = vsel %vm1097, %v1098, %v1096
  %v1100 = vrsqrt.pop %v1062
  %v1101 = vmul.f32 %v1062, %v1100
  %vm1102 = vcmp.eq.f32.partialorder %v1062, inf
  %v1103 = vsel %vm1102, %v1062, %v1101
  %vm1104 = vcmp.eq.f32.partialorder %v1062, 0.0
  %v1105 = vand.u32 %v1062, 2147483648
  %v1106 = vsel %vm1104, %v1105, %v1103
  %v1107 = vrsqrt.pop %v1065
  %v1108 = vmul.f32 %v1065, %v1107
  %vm1109 = vcmp.eq.f32.partialorder %v1065, inf
  %v1110 = vsel %vm1109, %v1065, %v1108
  %vm1111 = vcmp.eq.f32.partialorder %v1065, 0.0
  %v1112 = vand.u32 %v1065, 2147483648
  %v1113 = vsel %vm1111, %v1112, %v1110
  %v1114 = vrsqrt.pop %v1068
  %v1115 = vmul.f32 %v1068, %v1114
  %vm1116 = vcmp.eq.f32.partialorder %v1068, inf
  %v1117 = vsel %vm1116, %v1068, %v1115
  %vm1118 = vcmp.eq.f32.partialorder %v1068, 0.0
  %v1119 = vand.u32 %v1068, 2147483648
  %v1120 = vsel %vm1118, %v1119, %v1117
  %v1121 = vrsqrt.pop %v1071
  %v1122 = vmul.f32 %v1071, %v1121
  %vm1123 = vcmp.eq.f32.partialorder %v1071, inf
  %v1124 = vsel %vm1123, %v1071, %v1122
  %vm1125 = vcmp.eq.f32.partialorder %v1071, 0.0
  %v1126 = vand.u32 %v1071, 2147483648
  %v1127 = vsel %vm1125, %v1126, %v1124
  %v1128 = vadd.f32 %v1050, 1.0
  %v1129 = vadd.f32 %v1053, 1.0
  %v1130 = vadd.f32 %v1056, 1.0
  %v1131 = vadd.f32 %v1059, 1.0
  %v1132 = vadd.f32 %v1062, 1.0
  %v1133 = vadd.f32 %v1065, 1.0
  %v1134 = vadd.f32 %v1068, 1.0
  %v1135 = vadd.f32 %v1071, 1.0
  %v1136 = vadd.f32 %v1078, 1e-09
  %v1137 = vadd.f32 %v1085, 1e-09
  %v1138 = vadd.f32 %v1092, 1e-09
  %v1139 = vadd.f32 %v1099, 1e-09
  %v1140 = vadd.f32 %v1106, 1e-09
  %v1141 = vadd.f32 %v1113, 1e-09
  %v1142 = vadd.f32 %v1120, 1e-09
  %v1143 = vadd.f32 %v1127, 1e-09
  %v1144 = vmul.f32 %v1128, %v1136
  %v1145 = vmul.f32 %v1129, %v1137
  %v1146 = vmul.f32 %v1130, %v1138
  %v1147 = vmul.f32 %v1131, %v1139
  %v1148 = vmul.f32 %v1132, %v1140
  %v1149 = vmul.f32 %v1133, %v1141
  %v1150 = vmul.f32 %v1134, %v1142
  %v1151 = vmul.f32 %v1135, %v1143
  %v1152 = vrcp.pop %v1144
  %v1153 = vmul.f32 %v1050, %v1152
  %v1154 = vrcp.pop %v1145
  %v1155 = vmul.f32 %v1053, %v1154
  %v1156 = vrcp.pop %v1146
  %v1157 = vmul.f32 %v1056, %v1156
  %v1158 = vrcp.pop %v1147
  %v1159 = vmul.f32 %v1059, %v1158
  %v1160 = vrcp.pop %v1148
  %v1161 = vmul.f32 %v1062, %v1160
  %v1162 = vrcp.pop %v1149
  %v1163 = vmul.f32 %v1065, %v1162
  %v1164 = vrcp.pop %v1150
  %v1165 = vmul.f32 %v1068, %v1164
  %v1166 = vrcp.pop %v1151
  %v1167 = vmul.f32 %v1071, %v1166
  %v1168 = vmul.f32 %v1153, %v1032
  %v1169 = vmul.f32 %v1155, %v1033
  %v1170 = vmul.f32 %v1157, %v1034
  %v1171 = vmul.f32 %v1159, %v1035
  %v1172 = vmul.f32 %v1161, %v1036
  %v1173 = vmul.f32 %v1163, %v1037
  %v1174 = vmul.f32 %v1165, %v1038
  %v1175 = vmul.f32 %v1167, %v1039
  %v1176 = vmul.f32 %v169, %v1168
  %v1177 = vmul.f32 %v172, %v1169
  %v1178 = vmul.f32 %v177, %v1170
  %v1179 = vmul.f32 %v180, %v1171
  %v1180 = vmul.f32 %v185, %v1172
  %v1181 = vmul.f32 %v188, %v1173
  %v1182 = vmul.f32 %v193, %v1174
  %v1183 = vmul.f32 %v196, %v1175
  %v1184 = vsel %vm279, %v1176, 0.0
  %1185 = vadd.xlane.f32.xlu0 %v1184
  %v1186 = vpop.xlane.xlu0 %1185
  %v1187 = vsel %vm279, %v1177, 0.0
  %1188 = vadd.xlane.f32.xlu0 %v1187
  %v1189 = vpop.xlane.xlu0 %1188
  %v1190 = vsel %vm279, %v1178, 0.0
  %1191 = vadd.xlane.f32.xlu0 %v1190
  %v1192 = vpop.xlane.xlu0 %1191
  %v1193 = vsel %vm279, %v1179, 0.0
  %1194 = vadd.xlane.f32.xlu0 %v1193
  %v1195 = vpop.xlane.xlu0 %1194
  %v1196 = vsel %vm279, %v1180, 0.0
  %1197 = vadd.xlane.f32.xlu0 %v1196
  %v1198 = vpop.xlane.xlu0 %1197
  %v1199 = vsel %vm279, %v1181, 0.0
  %1200 = vadd.xlane.f32.xlu0 %v1199
  %v1201 = vpop.xlane.xlu0 %1200
  %v1202 = vsel %vm279, %v1182, 0.0
  %1203 = vadd.xlane.f32.xlu0 %v1202
  %v1204 = vpop.xlane.xlu0 %1203
  %v1205 = vsel %vm279, %v1183, 0.0
  %1206 = vadd.xlane.f32.xlu0 %v1205
  %v1207 = vpop.xlane.xlu0 %1206
  %v1208 = vadd.f32 %v1186, 0.0
  %v1209 = vadd.f32 %v1189, 0.0
  %v1210 = vadd.f32 %v1192, 0.0
  %v1211 = vadd.f32 %v1195, 0.0
  %v1212 = vadd.f32 %v1198, 0.0
  %v1213 = vadd.f32 %v1201, 0.0
  %v1214 = vadd.f32 %v1204, 0.0
  %v1215 = vadd.f32 %v1207, 0.0
  %v1216 = vmul.f32 %v201, %v1168
  %v1217 = vmul.f32 %v204, %v1169
  %v1218 = vmul.f32 %v209, %v1170
  %v1219 = vmul.f32 %v212, %v1171
  %v1220 = vmul.f32 %v217, %v1172
  %v1221 = vmul.f32 %v220, %v1173
  %v1222 = vmul.f32 %v225, %v1174
  %v1223 = vmul.f32 %v228, %v1175
  %v1224 = vsel %vm279, %v1216, 0.0
  %1225 = vadd.xlane.f32.xlu0 %v1224
  %v1226 = vpop.xlane.xlu0 %1225
  %v1227 = vsel %vm279, %v1217, 0.0
  %1228 = vadd.xlane.f32.xlu0 %v1227
  %v1229 = vpop.xlane.xlu0 %1228
  %v1230 = vsel %vm279, %v1218, 0.0
  %1231 = vadd.xlane.f32.xlu0 %v1230
  %v1232 = vpop.xlane.xlu0 %1231
  %v1233 = vsel %vm279, %v1219, 0.0
  %1234 = vadd.xlane.f32.xlu0 %v1233
  %v1235 = vpop.xlane.xlu0 %1234
  %v1236 = vsel %vm279, %v1220, 0.0
  %1237 = vadd.xlane.f32.xlu0 %v1236
  %v1238 = vpop.xlane.xlu0 %1237
  %v1239 = vsel %vm279, %v1221, 0.0
  %1240 = vadd.xlane.f32.xlu0 %v1239
  %v1241 = vpop.xlane.xlu0 %1240
  %v1242 = vsel %vm279, %v1222, 0.0
  %1243 = vadd.xlane.f32.xlu0 %v1242
  %v1244 = vpop.xlane.xlu0 %1243
  %v1245 = vsel %vm279, %v1223, 0.0
  %1246 = vadd.xlane.f32.xlu0 %v1245
  %v1247 = vpop.xlane.xlu0 %1246
  %v1248 = vadd.f32 %v1226, 0.0
  %v1249 = vadd.f32 %v1229, 0.0
  %v1250 = vadd.f32 %v1232, 0.0
  %v1251 = vadd.f32 %v1235, 0.0
  %v1252 = vadd.f32 %v1238, 0.0
  %v1253 = vadd.f32 %v1241, 0.0
  %v1254 = vadd.f32 %v1244, 0.0
  %v1255 = vadd.f32 %v1247, 0.0
  %v1256 = vsub.f32 %v1208, %v1248
  %v1257 = vsub.f32 %v1209, %v1249
  %v1258 = vsub.f32 %v1210, %v1250
  %v1259 = vsub.f32 %v1211, %v1251
  %v1260 = vsub.f32 %v1212, %v1252
  %v1261 = vsub.f32 %v1213, %v1253
  %v1262 = vsub.f32 %v1214, %v1254
  %v1263 = vsub.f32 %v1215, %v1255
  %v1264 = vxor.u32 %v1256, 2147483648
  %v1265 = vxor.u32 %v1257, 2147483648
  %v1266 = vxor.u32 %v1258, 2147483648
  %v1267 = vxor.u32 %v1259, 2147483648
  %v1268 = vxor.u32 %v1260, 2147483648
  %v1269 = vxor.u32 %v1261, 2147483648
  %v1270 = vxor.u32 %v1262, 2147483648
  %v1271 = vxor.u32 %v1263, 2147483648
  %v1272 = vmul.f32 %v1264, 1.442695
  %v1273 = vpow.pop %v1272
  %v1274 = vmul.f32 %v1265, 1.442695
  %v1275 = vpow.pop %v1274
  %v1276 = vmul.f32 %v1266, 1.442695
  %v1277 = vpow.pop %v1276
  %v1278 = vmul.f32 %v1267, 1.442695
  %v1279 = vpow.pop %v1278
  %v1280 = vmul.f32 %v1268, 1.442695
  %v1281 = vpow.pop %v1280
  %v1282 = vmul.f32 %v1269, 1.442695
  %v1283 = vpow.pop %v1282
  %v1284 = vmul.f32 %v1270, 1.442695
  %v1285 = vpow.pop %v1284
  %v1286 = vmul.f32 %v1271, 1.442695
  %v1287 = vpow.pop %v1286
  %v1288 = vadd.f32 %v1273, 1.0
  %v1289 = vadd.f32 %v1275, 1.0
  %v1290 = vadd.f32 %v1277, 1.0
  %v1291 = vadd.f32 %v1279, 1.0
  %v1292 = vadd.f32 %v1281, 1.0
  %v1293 = vadd.f32 %v1283, 1.0
  %v1294 = vadd.f32 %v1285, 1.0
  %v1295 = vadd.f32 %v1287, 1.0
  %v1296 = vrcp.pop %v1288
  %v1297 = vmul.f32 1.0, %v1296
  %v1298 = vrcp.pop %v1289
  %v1299 = vmul.f32 1.0, %v1298
  %v1300 = vrcp.pop %v1290
  %v1301 = vmul.f32 1.0, %v1300
  %v1302 = vrcp.pop %v1291
  %v1303 = vmul.f32 1.0, %v1302
  %v1304 = vrcp.pop %v1292
  %v1305 = vmul.f32 1.0, %v1304
  %v1306 = vrcp.pop %v1293
  %v1307 = vmul.f32 1.0, %v1306
  %v1308 = vrcp.pop %v1294
  %v1309 = vmul.f32 1.0, %v1308
  %v1310 = vrcp.pop %v1295
  %v1311 = vmul.f32 1.0, %v1310
  %v1312 = vmul.f32 %v1297, %v169
  %v1313 = vmul.f32 %v1299, %v172
  %v1314 = vmul.f32 %v1301, %v177
  %v1315 = vmul.f32 %v1303, %v180
  %v1316 = vmul.f32 %v1305, %v185
  %v1317 = vmul.f32 %v1307, %v188
  %v1318 = vmul.f32 %v1309, %v193
  %v1319 = vmul.f32 %v1311, %v196
  %v1320 = vsub.f32 1.0, %v1297
  %v1321 = vsub.f32 1.0, %v1299
  %v1322 = vsub.f32 1.0, %v1301
  %v1323 = vsub.f32 1.0, %v1303
  %v1324 = vsub.f32 1.0, %v1305
  %v1325 = vsub.f32 1.0, %v1307
  %v1326 = vsub.f32 1.0, %v1309
  %v1327 = vsub.f32 1.0, %v1311
  %v1328 = vmul.f32 %v1320, %v201
  %v1329 = vmul.f32 %v1321, %v204
  %v1330 = vmul.f32 %v1322, %v209
  %v1331 = vmul.f32 %v1323, %v212
  %v1332 = vmul.f32 %v1324, %v217
  %v1333 = vmul.f32 %v1325, %v220
  %v1334 = vmul.f32 %v1326, %v225
  %v1335 = vmul.f32 %v1327, %v228
  %v1336 = vadd.f32 %v1312, %v1328
  %v1337 = vadd.f32 %v1313, %v1329
  %v1338 = vadd.f32 %v1314, %v1330
  %v1339 = vadd.f32 %v1315, %v1331
  %v1340 = vadd.f32 %v1316, %v1332
  %v1341 = vadd.f32 %v1317, %v1333
  %v1342 = vadd.f32 %v1318, %v1334
  %v1343 = vadd.f32 %v1319, %v1335
  %v1344 = vmul.f32 %v1336, %v1336
  %v1345 = vmul.f32 %v1337, %v1337
  %v1346 = vmul.f32 %v1338, %v1338
  %v1347 = vmul.f32 %v1339, %v1339
  %v1348 = vmul.f32 %v1340, %v1340
  %v1349 = vmul.f32 %v1341, %v1341
  %v1350 = vmul.f32 %v1342, %v1342
  %v1351 = vmul.f32 %v1343, %v1343
  %v1352 = vsel %vm279, %v1344, 0.0
  %1353 = vadd.xlane.f32.xlu0 %v1352
  %v1354 = vpop.xlane.xlu0 %1353
  %v1355 = vsel %vm279, %v1345, 0.0
  %1356 = vadd.xlane.f32.xlu0 %v1355
  %v1357 = vpop.xlane.xlu0 %1356
  %v1358 = vsel %vm279, %v1346, 0.0
  %1359 = vadd.xlane.f32.xlu0 %v1358
  %v1360 = vpop.xlane.xlu0 %1359
  %v1361 = vsel %vm279, %v1347, 0.0
  %1362 = vadd.xlane.f32.xlu0 %v1361
  %v1363 = vpop.xlane.xlu0 %1362
  %v1364 = vsel %vm279, %v1348, 0.0
  %1365 = vadd.xlane.f32.xlu0 %v1364
  %v1366 = vpop.xlane.xlu0 %1365
  %v1367 = vsel %vm279, %v1349, 0.0
  %1368 = vadd.xlane.f32.xlu0 %v1367
  %v1369 = vpop.xlane.xlu0 %1368
  %v1370 = vsel %vm279, %v1350, 0.0
  %1371 = vadd.xlane.f32.xlu0 %v1370
  %v1372 = vpop.xlane.xlu0 %1371
  %v1373 = vsel %vm279, %v1351, 0.0
  %1374 = vadd.xlane.f32.xlu0 %v1373
  %v1375 = vpop.xlane.xlu0 %1374
  %v1376 = vrsqrt.pop %v1354
  %v1377 = vmul.f32 %v1354, %v1376
  %vm1378 = vcmp.eq.f32.partialorder %v1354, inf
  %v1379 = vsel %vm1378, %v1354, %v1377
  %vm1380 = vcmp.eq.f32.partialorder %v1354, 0.0
  %v1381 = vand.u32 %v1354, 2147483648
  %v1382 = vsel %vm1380, %v1381, %v1379
  %v1383 = vrsqrt.pop %v1357
  %v1384 = vmul.f32 %v1357, %v1383
  %vm1385 = vcmp.eq.f32.partialorder %v1357, inf
  %v1386 = vsel %vm1385, %v1357, %v1384
  %vm1387 = vcmp.eq.f32.partialorder %v1357, 0.0
  %v1388 = vand.u32 %v1357, 2147483648
  %v1389 = vsel %vm1387, %v1388, %v1386
  %v1390 = vrsqrt.pop %v1360
  %v1391 = vmul.f32 %v1360, %v1390
  %vm1392 = vcmp.eq.f32.partialorder %v1360, inf
  %v1393 = vsel %vm1392, %v1360, %v1391
  %vm1394 = vcmp.eq.f32.partialorder %v1360, 0.0
  %v1395 = vand.u32 %v1360, 2147483648
  %v1396 = vsel %vm1394, %v1395, %v1393
  %v1397 = vrsqrt.pop %v1363
  %v1398 = vmul.f32 %v1363, %v1397
  %vm1399 = vcmp.eq.f32.partialorder %v1363, inf
  %v1400 = vsel %vm1399, %v1363, %v1398
  %vm1401 = vcmp.eq.f32.partialorder %v1363, 0.0
  %v1402 = vand.u32 %v1363, 2147483648
  %v1403 = vsel %vm1401, %v1402, %v1400
  %v1404 = vrsqrt.pop %v1366
  %v1405 = vmul.f32 %v1366, %v1404
  %vm1406 = vcmp.eq.f32.partialorder %v1366, inf
  %v1407 = vsel %vm1406, %v1366, %v1405
  %vm1408 = vcmp.eq.f32.partialorder %v1366, 0.0
  %v1409 = vand.u32 %v1366, 2147483648
  %v1410 = vsel %vm1408, %v1409, %v1407
  %v1411 = vrsqrt.pop %v1369
  %v1412 = vmul.f32 %v1369, %v1411
  %vm1413 = vcmp.eq.f32.partialorder %v1369, inf
  %v1414 = vsel %vm1413, %v1369, %v1412
  %vm1415 = vcmp.eq.f32.partialorder %v1369, 0.0
  %v1416 = vand.u32 %v1369, 2147483648
  %v1417 = vsel %vm1415, %v1416, %v1414
  %v1418 = vrsqrt.pop %v1372
  %v1419 = vmul.f32 %v1372, %v1418
  %vm1420 = vcmp.eq.f32.partialorder %v1372, inf
  %v1421 = vsel %vm1420, %v1372, %v1419
  %vm1422 = vcmp.eq.f32.partialorder %v1372, 0.0
  %v1423 = vand.u32 %v1372, 2147483648
  %v1424 = vsel %vm1422, %v1423, %v1421
  %v1425 = vrsqrt.pop %v1375
  %v1426 = vmul.f32 %v1375, %v1425
  %vm1427 = vcmp.eq.f32.partialorder %v1375, inf
  %v1428 = vsel %vm1427, %v1375, %v1426
  %vm1429 = vcmp.eq.f32.partialorder %v1375, 0.0
  %v1430 = vand.u32 %v1375, 2147483648
  %v1431 = vsel %vm1429, %v1430, %v1428
  %v1432 = vadd.f32 %v1354, 1.0
  %v1433 = vadd.f32 %v1357, 1.0
  %v1434 = vadd.f32 %v1360, 1.0
  %v1435 = vadd.f32 %v1363, 1.0
  %v1436 = vadd.f32 %v1366, 1.0
  %v1437 = vadd.f32 %v1369, 1.0
  %v1438 = vadd.f32 %v1372, 1.0
  %v1439 = vadd.f32 %v1375, 1.0
  %v1440 = vadd.f32 %v1382, 1e-09
  %v1441 = vadd.f32 %v1389, 1e-09
  %v1442 = vadd.f32 %v1396, 1e-09
  %v1443 = vadd.f32 %v1403, 1e-09
  %v1444 = vadd.f32 %v1410, 1e-09
  %v1445 = vadd.f32 %v1417, 1e-09
  %v1446 = vadd.f32 %v1424, 1e-09
  %v1447 = vadd.f32 %v1431, 1e-09
  %v1448 = vmul.f32 %v1432, %v1440
  %v1449 = vmul.f32 %v1433, %v1441
  %v1450 = vmul.f32 %v1434, %v1442
  %v1451 = vmul.f32 %v1435, %v1443
  %v1452 = vmul.f32 %v1436, %v1444
  %v1453 = vmul.f32 %v1437, %v1445
  %v1454 = vmul.f32 %v1438, %v1446
  %v1455 = vmul.f32 %v1439, %v1447
  %v1456 = vrcp.pop %v1448
  %v1457 = vmul.f32 %v1354, %v1456
  %v1458 = vrcp.pop %v1449
  %v1459 = vmul.f32 %v1357, %v1458
  %v1460 = vrcp.pop %v1450
  %v1461 = vmul.f32 %v1360, %v1460
  %v1462 = vrcp.pop %v1451
  %v1463 = vmul.f32 %v1363, %v1462
  %v1464 = vrcp.pop %v1452
  %v1465 = vmul.f32 %v1366, %v1464
  %v1466 = vrcp.pop %v1453
  %v1467 = vmul.f32 %v1369, %v1466
  %v1468 = vrcp.pop %v1454
  %v1469 = vmul.f32 %v1372, %v1468
  %v1470 = vrcp.pop %v1455
  %v1471 = vmul.f32 %v1375, %v1470
  %v1472 = vmul.f32 %v1457, %v1336
  %v1473 = vmul.f32 %v1459, %v1337
  %v1474 = vmul.f32 %v1461, %v1338
  %v1475 = vmul.f32 %v1463, %v1339
  %v1476 = vmul.f32 %v1465, %v1340
  %v1477 = vmul.f32 %v1467, %v1341
  %v1478 = vmul.f32 %v1469, %v1342
  %v1479 = vmul.f32 %v1471, %v1343
  %v1480 = vmul.f32 %v169, %v1472
  %v1481 = vmul.f32 %v172, %v1473
  %v1482 = vmul.f32 %v177, %v1474
  %v1483 = vmul.f32 %v180, %v1475
  %v1484 = vmul.f32 %v185, %v1476
  %v1485 = vmul.f32 %v188, %v1477
  %v1486 = vmul.f32 %v193, %v1478
  %v1487 = vmul.f32 %v196, %v1479
  %v1488 = vsel %vm279, %v1480, 0.0
  %1489 = vadd.xlane.f32.xlu0 %v1488
  %v1490 = vpop.xlane.xlu0 %1489
  %v1491 = vsel %vm279, %v1481, 0.0
  %1492 = vadd.xlane.f32.xlu0 %v1491
  %v1493 = vpop.xlane.xlu0 %1492
  %v1494 = vsel %vm279, %v1482, 0.0
  %1495 = vadd.xlane.f32.xlu0 %v1494
  %v1496 = vpop.xlane.xlu0 %1495
  %v1497 = vsel %vm279, %v1483, 0.0
  %1498 = vadd.xlane.f32.xlu0 %v1497
  %v1499 = vpop.xlane.xlu0 %1498
  %v1500 = vsel %vm279, %v1484, 0.0
  %1501 = vadd.xlane.f32.xlu0 %v1500
  %v1502 = vpop.xlane.xlu0 %1501
  %v1503 = vsel %vm279, %v1485, 0.0
  %1504 = vadd.xlane.f32.xlu0 %v1503
  %v1505 = vpop.xlane.xlu0 %1504
  %v1506 = vsel %vm279, %v1486, 0.0
  %1507 = vadd.xlane.f32.xlu0 %v1506
  %v1508 = vpop.xlane.xlu0 %1507
  %v1509 = vsel %vm279, %v1487, 0.0
  %1510 = vadd.xlane.f32.xlu0 %v1509
  %v1511 = vpop.xlane.xlu0 %1510
  %v1512 = vadd.f32 %v1208, %v1490
  %v1513 = vadd.f32 %v1209, %v1493
  %v1514 = vadd.f32 %v1210, %v1496
  %v1515 = vadd.f32 %v1211, %v1499
  %v1516 = vadd.f32 %v1212, %v1502
  %v1517 = vadd.f32 %v1213, %v1505
  %v1518 = vadd.f32 %v1214, %v1508
  %v1519 = vadd.f32 %v1215, %v1511
  %v1520 = vmul.f32 %v201, %v1472
  %v1521 = vmul.f32 %v204, %v1473
  %v1522 = vmul.f32 %v209, %v1474
  %v1523 = vmul.f32 %v212, %v1475
  %v1524 = vmul.f32 %v217, %v1476
  %v1525 = vmul.f32 %v220, %v1477
  %v1526 = vmul.f32 %v225, %v1478
  %v1527 = vmul.f32 %v228, %v1479
  %v1528 = vsel %vm279, %v1520, 0.0
  %1529 = vadd.xlane.f32.xlu0 %v1528
  %v1530 = vpop.xlane.xlu0 %1529
  %v1531 = vsel %vm279, %v1521, 0.0
  %1532 = vadd.xlane.f32.xlu0 %v1531
  %v1533 = vpop.xlane.xlu0 %1532
  %v1534 = vsel %vm279, %v1522, 0.0
  %1535 = vadd.xlane.f32.xlu0 %v1534
  %v1536 = vpop.xlane.xlu0 %1535
  %v1537 = vsel %vm279, %v1523, 0.0
  %1538 = vadd.xlane.f32.xlu0 %v1537
  %v1539 = vpop.xlane.xlu0 %1538
  %v1540 = vsel %vm279, %v1524, 0.0
  %1541 = vadd.xlane.f32.xlu0 %v1540
  %v1542 = vpop.xlane.xlu0 %1541
  %v1543 = vsel %vm279, %v1525, 0.0
  %1544 = vadd.xlane.f32.xlu0 %v1543
  %v1545 = vpop.xlane.xlu0 %1544
  %v1546 = vsel %vm279, %v1526, 0.0
  %1547 = vadd.xlane.f32.xlu0 %v1546
  %v1548 = vpop.xlane.xlu0 %1547
  %v1549 = vsel %vm279, %v1527, 0.0
  %1550 = vadd.xlane.f32.xlu0 %v1549
  %v1551 = vpop.xlane.xlu0 %1550
  %v1552 = vadd.f32 %v1248, %v1530
  %v1553 = vadd.f32 %v1249, %v1533
  %v1554 = vadd.f32 %v1250, %v1536
  %v1555 = vadd.f32 %v1251, %v1539
  %v1556 = vadd.f32 %v1252, %v1542
  %v1557 = vadd.f32 %v1253, %v1545
  %v1558 = vadd.f32 %v1254, %v1548
  %v1559 = vadd.f32 %v1255, %v1551
  %v1560 = vsub.f32 %v1512, %v1552
  %v1561 = vsub.f32 %v1513, %v1553
  %v1562 = vsub.f32 %v1514, %v1554
  %v1563 = vsub.f32 %v1515, %v1555
  %v1564 = vsub.f32 %v1516, %v1556
  %v1565 = vsub.f32 %v1517, %v1557
  %v1566 = vsub.f32 %v1518, %v1558
  %v1567 = vsub.f32 %v1519, %v1559
  %v1568 = vxor.u32 %v1560, 2147483648
  %v1569 = vxor.u32 %v1561, 2147483648
  %v1570 = vxor.u32 %v1562, 2147483648
  %v1571 = vxor.u32 %v1563, 2147483648
  %v1572 = vxor.u32 %v1564, 2147483648
  %v1573 = vxor.u32 %v1565, 2147483648
  %v1574 = vxor.u32 %v1566, 2147483648
  %v1575 = vxor.u32 %v1567, 2147483648
  %v1576 = vmul.f32 %v1568, 1.442695
  %v1577 = vpow.pop %v1576
  %v1578 = vmul.f32 %v1569, 1.442695
  %v1579 = vpow.pop %v1578
  %v1580 = vmul.f32 %v1570, 1.442695
  %v1581 = vpow.pop %v1580
  %v1582 = vmul.f32 %v1571, 1.442695
  %v1583 = vpow.pop %v1582
  %v1584 = vmul.f32 %v1572, 1.442695
  %v1585 = vpow.pop %v1584
  %v1586 = vmul.f32 %v1573, 1.442695
  %v1587 = vpow.pop %v1586
  %v1588 = vmul.f32 %v1574, 1.442695
  %v1589 = vpow.pop %v1588
  %v1590 = vmul.f32 %v1575, 1.442695
  %v1591 = vpow.pop %v1590
  %v1592 = vadd.f32 %v1577, 1.0
  %v1593 = vadd.f32 %v1579, 1.0
  %v1594 = vadd.f32 %v1581, 1.0
  %v1595 = vadd.f32 %v1583, 1.0
  %v1596 = vadd.f32 %v1585, 1.0
  %v1597 = vadd.f32 %v1587, 1.0
  %v1598 = vadd.f32 %v1589, 1.0
  %v1599 = vadd.f32 %v1591, 1.0
  %v1600 = vrcp.pop %v1592
  %v1601 = vmul.f32 1.0, %v1600
  %v1602 = vrcp.pop %v1593
  %v1603 = vmul.f32 1.0, %v1602
  %v1604 = vrcp.pop %v1594
  %v1605 = vmul.f32 1.0, %v1604
  %v1606 = vrcp.pop %v1595
  %v1607 = vmul.f32 1.0, %v1606
  %v1608 = vrcp.pop %v1596
  %v1609 = vmul.f32 1.0, %v1608
  %v1610 = vrcp.pop %v1597
  %v1611 = vmul.f32 1.0, %v1610
  %v1612 = vrcp.pop %v1598
  %v1613 = vmul.f32 1.0, %v1612
  %v1614 = vrcp.pop %v1599
  %v1615 = vmul.f32 1.0, %v1614
  %v1616 = vmul.f32 %v1601, %v169
  %v1617 = vmul.f32 %v1603, %v172
  %v1618 = vmul.f32 %v1605, %v177
  %v1619 = vmul.f32 %v1607, %v180
  %v1620 = vmul.f32 %v1609, %v185
  %v1621 = vmul.f32 %v1611, %v188
  %v1622 = vmul.f32 %v1613, %v193
  %v1623 = vmul.f32 %v1615, %v196
  %v1624 = vsub.f32 1.0, %v1601
  %v1625 = vsub.f32 1.0, %v1603
  %v1626 = vsub.f32 1.0, %v1605
  %v1627 = vsub.f32 1.0, %v1607
  %v1628 = vsub.f32 1.0, %v1609
  %v1629 = vsub.f32 1.0, %v1611
  %v1630 = vsub.f32 1.0, %v1613
  %v1631 = vsub.f32 1.0, %v1615
  %v1632 = vmul.f32 %v1624, %v201
  %v1633 = vmul.f32 %v1625, %v204
  %v1634 = vmul.f32 %v1626, %v209
  %v1635 = vmul.f32 %v1627, %v212
  %v1636 = vmul.f32 %v1628, %v217
  %v1637 = vmul.f32 %v1629, %v220
  %v1638 = vmul.f32 %v1630, %v225
  %v1639 = vmul.f32 %v1631, %v228
  %v1640 = vadd.f32 %v1616, %v1632
  %v1641 = vadd.f32 %v1617, %v1633
  %v1642 = vadd.f32 %v1618, %v1634
  %v1643 = vadd.f32 %v1619, %v1635
  %v1644 = vadd.f32 %v1620, %v1636
  %v1645 = vadd.f32 %v1621, %v1637
  %v1646 = vadd.f32 %v1622, %v1638
  %v1647 = vadd.f32 %v1623, %v1639
  %v1648 = vmul.f32 %v1640, %v1640
  %v1649 = vmul.f32 %v1641, %v1641
  %v1650 = vmul.f32 %v1642, %v1642
  %v1651 = vmul.f32 %v1643, %v1643
  %v1652 = vmul.f32 %v1644, %v1644
  %v1653 = vmul.f32 %v1645, %v1645
  %v1654 = vmul.f32 %v1646, %v1646
  %v1655 = vmul.f32 %v1647, %v1647
  %v1656 = vsel %vm279, %v1648, 0.0
  %1657 = vadd.xlane.f32.xlu0 %v1656
  %v1658 = vpop.xlane.xlu0 %1657
  %v1659 = vsel %vm279, %v1649, 0.0
  %1660 = vadd.xlane.f32.xlu0 %v1659
  %v1661 = vpop.xlane.xlu0 %1660
  %v1662 = vsel %vm279, %v1650, 0.0
  %1663 = vadd.xlane.f32.xlu0 %v1662
  %v1664 = vpop.xlane.xlu0 %1663
  %v1665 = vsel %vm279, %v1651, 0.0
  %1666 = vadd.xlane.f32.xlu0 %v1665
  %v1667 = vpop.xlane.xlu0 %1666
  %v1668 = vsel %vm279, %v1652, 0.0
  %1669 = vadd.xlane.f32.xlu0 %v1668
  %v1670 = vpop.xlane.xlu0 %1669
  %v1671 = vsel %vm279, %v1653, 0.0
  %1672 = vadd.xlane.f32.xlu0 %v1671
  %v1673 = vpop.xlane.xlu0 %1672
  %v1674 = vsel %vm279, %v1654, 0.0
  %1675 = vadd.xlane.f32.xlu0 %v1674
  %v1676 = vpop.xlane.xlu0 %1675
  %v1677 = vsel %vm279, %v1655, 0.0
  %1678 = vadd.xlane.f32.xlu0 %v1677
  %v1679 = vpop.xlane.xlu0 %1678
  %v1680 = vrsqrt.pop %v1658
  %v1681 = vmul.f32 %v1658, %v1680
  %vm1682 = vcmp.eq.f32.partialorder %v1658, inf
  %v1683 = vsel %vm1682, %v1658, %v1681
  %vm1684 = vcmp.eq.f32.partialorder %v1658, 0.0
  %v1685 = vand.u32 %v1658, 2147483648
  %v1686 = vsel %vm1684, %v1685, %v1683
  %v1687 = vrsqrt.pop %v1661
  %v1688 = vmul.f32 %v1661, %v1687
  %vm1689 = vcmp.eq.f32.partialorder %v1661, inf
  %v1690 = vsel %vm1689, %v1661, %v1688
  %vm1691 = vcmp.eq.f32.partialorder %v1661, 0.0
  %v1692 = vand.u32 %v1661, 2147483648
  %v1693 = vsel %vm1691, %v1692, %v1690
  %v1694 = vrsqrt.pop %v1664
  %v1695 = vmul.f32 %v1664, %v1694
  %vm1696 = vcmp.eq.f32.partialorder %v1664, inf
  %v1697 = vsel %vm1696, %v1664, %v1695
  %vm1698 = vcmp.eq.f32.partialorder %v1664, 0.0
  %v1699 = vand.u32 %v1664, 2147483648
  %v1700 = vsel %vm1698, %v1699, %v1697
  %v1701 = vrsqrt.pop %v1667
  %v1702 = vmul.f32 %v1667, %v1701
  %vm1703 = vcmp.eq.f32.partialorder %v1667, inf
  %v1704 = vsel %vm1703, %v1667, %v1702
  %vm1705 = vcmp.eq.f32.partialorder %v1667, 0.0
  %v1706 = vand.u32 %v1667, 2147483648
  %v1707 = vsel %vm1705, %v1706, %v1704
  %v1708 = vrsqrt.pop %v1670
  %v1709 = vmul.f32 %v1670, %v1708
  %vm1710 = vcmp.eq.f32.partialorder %v1670, inf
  %v1711 = vsel %vm1710, %v1670, %v1709
  %vm1712 = vcmp.eq.f32.partialorder %v1670, 0.0
  %v1713 = vand.u32 %v1670, 2147483648
  %v1714 = vsel %vm1712, %v1713, %v1711
  %v1715 = vrsqrt.pop %v1673
  %v1716 = vmul.f32 %v1673, %v1715
  %vm1717 = vcmp.eq.f32.partialorder %v1673, inf
  %v1718 = vsel %vm1717, %v1673, %v1716
  %vm1719 = vcmp.eq.f32.partialorder %v1673, 0.0
  %v1720 = vand.u32 %v1673, 2147483648
  %v1721 = vsel %vm1719, %v1720, %v1718
  %v1722 = vrsqrt.pop %v1676
  %v1723 = vmul.f32 %v1676, %v1722
  %vm1724 = vcmp.eq.f32.partialorder %v1676, inf
  %v1725 = vsel %vm1724, %v1676, %v1723
  %vm1726 = vcmp.eq.f32.partialorder %v1676, 0.0
  %v1727 = vand.u32 %v1676, 2147483648
  %v1728 = vsel %vm1726, %v1727, %v1725
  %v1729 = vrsqrt.pop %v1679
  %v1730 = vmul.f32 %v1679, %v1729
  %vm1731 = vcmp.eq.f32.partialorder %v1679, inf
  %v1732 = vsel %vm1731, %v1679, %v1730
  %vm1733 = vcmp.eq.f32.partialorder %v1679, 0.0
  %v1734 = vand.u32 %v1679, 2147483648
  %v1735 = vsel %vm1733, %v1734, %v1732
  %v1736 = vadd.f32 %v1658, 1.0
  %v1737 = vadd.f32 %v1661, 1.0
  %v1738 = vadd.f32 %v1664, 1.0
  %v1739 = vadd.f32 %v1667, 1.0
  %v1740 = vadd.f32 %v1670, 1.0
  %v1741 = vadd.f32 %v1673, 1.0
  %v1742 = vadd.f32 %v1676, 1.0
  %v1743 = vadd.f32 %v1679, 1.0
  %v1744 = vadd.f32 %v1686, 1e-09
  %v1745 = vadd.f32 %v1693, 1e-09
  %v1746 = vadd.f32 %v1700, 1e-09
  %v1747 = vadd.f32 %v1707, 1e-09
  %v1748 = vadd.f32 %v1714, 1e-09
  %v1749 = vadd.f32 %v1721, 1e-09
  %v1750 = vadd.f32 %v1728, 1e-09
  %v1751 = vadd.f32 %v1735, 1e-09
  %v1752 = vmul.f32 %v1736, %v1744
  %v1753 = vmul.f32 %v1737, %v1745
  %v1754 = vmul.f32 %v1738, %v1746
  %v1755 = vmul.f32 %v1739, %v1747
  %v1756 = vmul.f32 %v1740, %v1748
  %v1757 = vmul.f32 %v1741, %v1749
  %v1758 = vmul.f32 %v1742, %v1750
  %v1759 = vmul.f32 %v1743, %v1751
  %v1760 = vrcp.pop %v1752
  %v1761 = vmul.f32 %v1658, %v1760
  %v1762 = vrcp.pop %v1753
  %v1763 = vmul.f32 %v1661, %v1762
  %v1764 = vrcp.pop %v1754
  %v1765 = vmul.f32 %v1664, %v1764
  %v1766 = vrcp.pop %v1755
  %v1767 = vmul.f32 %v1667, %v1766
  %v1768 = vrcp.pop %v1756
  %v1769 = vmul.f32 %v1670, %v1768
  %v1770 = vrcp.pop %v1757
  %v1771 = vmul.f32 %v1673, %v1770
  %v1772 = vrcp.pop %v1758
  %v1773 = vmul.f32 %v1676, %v1772
  %v1774 = vrcp.pop %v1759
  %v1775 = vmul.f32 %v1679, %v1774
  %v1776 = vmul.f32 %v1761, %v1640
  %v1777 = vmul.f32 %v1763, %v1641
  %v1778 = vmul.f32 %v1765, %v1642
  %v1779 = vmul.f32 %v1767, %v1643
  %v1780 = vmul.f32 %v1769, %v1644
  %v1781 = vmul.f32 %v1771, %v1645
  %v1782 = vmul.f32 %v1773, %v1646
  %v1783 = vmul.f32 %v1775, %v1647
  %v1784 = vpack.c.bf16 %v1009, %v1008
  %v1785 = vpack.c.bf16 %v1011, %v1010
  %v1786 = vpack.c.bf16 %v1013, %v1012
  %v1787 = vpack.c.bf16 %v1015, %v1014
  %v1789 = vsel %vm279, %v1784, 0
  %v1792 = vsel %vm279, %v1785, 0
  %v1795 = vsel %vm279, %v1786, 0
  %v1798 = vsel %vm279, %v1787, 0
  %1800 = vmatprep.subr.bf16.mxu0 0
  %1801 = vmatpush1.bf16.xpose.msra.mxu0 %v1789
  %1802 = vmatprep.subr.bf16.mxu0 0
  %1803 = vmatpush1.bf16.xpose.msra.mxu0 %v1792
  %1804 = vmatprep.subr.bf16.mxu0 0
  %1805 = vmatpush1.bf16.xpose.msra.mxu0 %v1795
  %1806 = vmatprep.subr.bf16.mxu0 0
  %1807 = vmatpush1.bf16.xpose.msra.mxu0 %v1798
  %1808 = vmatprep.subr.bf16.mxu0 0
  %1809 = vmatpush1.bf16.xpose.msra.mxu0 0
  %1810 = vmatprep.subr.bf16.mxu0 0
  %1811 = vmatpush1.bf16.xpose.msra.mxu0 0
  %1812 = vmatprep.subr.bf16.mxu0 0
  %1813 = vmatpush1.bf16.xpose.msra.mxu0 0
  %1814 = vmatprep.subr.bf16.mxu0 0
  %1815 = vmatpush1.bf16.xpose.msra.mxu0 0
  %1816 = vmatprep.subr.bf16.mxu0 0
  %1817 = vmatpush1.bf16.xpose.msra.mxu0 0
  %1818 = vmatprep.subr.bf16.mxu0 0
  %1819 = vmatpush1.bf16.xpose.msra.mxu0 0
  %1820 = vmatprep.subr.bf16.mxu0 0
  %1821 = vmatpush1.bf16.xpose.msra.mxu0 0
  %1822 = vmatprep.subr.bf16.mxu0 0
  %1823 = vmatpush1.bf16.xpose.msra.mxu0 0
  %1824 = vmatprep.subr.bf16.mxu0 0
  %1825 = vmatpush1.bf16.xpose.msra.mxu0 0
  %1826 = vmatprep.subr.bf16.mxu0 0
  %1827 = vmatpush1.bf16.xpose.msra.mxu0 0
  %1828 = vmatprep.subr.bf16.mxu0 0
  %1829 = vmatpush1.bf16.xpose.msra.mxu0 0
  %1830 = vmatprep.subr.bf16.mxu0 0
  %1831 = vmatpush1.bf16.xpose.msra.mxu0 0
  %1832 = vmatprep.mubr.bf16.mxu0 0
  %1833 = vmatmul.mubr.bf16.gmra.mrb[0].mxu0 %v1789
  %v1834 = vpop.f32.mrb[0].mxu0
  %v1835 = vadd.f32 %v52, %v1834
  %v1836 = vpop.f32.mrb[0].mxu0
  %v1837 = vpop.f32.mrb[0].mxu0
  %v1838 = vadd.f32 %v53, %v1837
  %v1839 = vpop.f32.mrb[0].mxu0
  %1840 = vmatprep.mubr.bf16.mxu0 0
  %1841 = vmatmul.mubr.bf16.gmra.mrb[0].mxu0 %v1792
  %v1842 = vpop.f32.mrb[0].mxu0
  %v1843 = vadd.f32 %v54, %v1842
  %v1844 = vpop.f32.mrb[0].mxu0
  %v1845 = vpop.f32.mrb[0].mxu0
  %v1846 = vadd.f32 %v55, %v1845
  %v1847 = vpop.f32.mrb[0].mxu0
  %1848 = vmatprep.mubr.bf16.mxu0 0
  %1849 = vmatmul.mubr.bf16.gmra.mrb[0].mxu0 %v1795
  %v1850 = vpop.f32.mrb[0].mxu0
  %v1851 = vadd.f32 %v56, %v1850
  %v1852 = vpop.f32.mrb[0].mxu0
  %v1853 = vpop.f32.mrb[0].mxu0
  %v1854 = vadd.f32 %v57, %v1853
  %v1855 = vpop.f32.mrb[0].mxu0
  %1856 = vmatprep.mubr.bf16.mxu0 0
  %1857 = vmatmul.mubr.bf16.gmra.mrb[0].mxu0 %v1798
  %v1858 = vpop.f32.mrb[0].mxu0
  %v1859 = vadd.f32 %v58, %v1858
  %v1860 = vpop.f32.mrb[0].mxu0
  %v1861 = vpop.f32.mrb[0].mxu0
  %v1862 = vadd.f32 %v59, %v1861
  %v1863 = vpop.f32.mrb[0].mxu0
  %1864 = vdwg.mxu0
  %v1865 = vsel %vm109, %v1835, -inf
  %1866 = vmax.xlane.f32.xlu0 %v1865
  %v1867 = vpop.xlane.xlu0 %1866
  %v1868 = vsel %vm109, %v1838, -inf
  %1869 = vmax.xlane.f32.xlu0 %v1868
  %v1870 = vpop.xlane.xlu0 %1869
  %v1871 = vsel %vm109, %v1843, -inf
  %1872 = vmax.xlane.f32.xlu0 %v1871
  %v1873 = vpop.xlane.xlu0 %1872
  %v1874 = vsel %vm109, %v1846, -inf
  %1875 = vmax.xlane.f32.xlu0 %v1874
  %v1876 = vpop.xlane.xlu0 %1875
  %v1877 = vsel %vm109, %v1851, -inf
  %1878 = vmax.xlane.f32.xlu0 %v1877
  %v1879 = vpop.xlane.xlu0 %1878
  %v1880 = vsel %vm109, %v1854, -inf
  %1881 = vmax.xlane.f32.xlu0 %v1880
  %v1882 = vpop.xlane.xlu0 %1881
  %v1883 = vsel %vm109, %v1859, -inf
  %1884 = vmax.xlane.f32.xlu0 %v1883
  %v1885 = vpop.xlane.xlu0 %1884
  %v1886 = vsel %vm109, %v1862, -inf
  %1887 = vmax.xlane.f32.xlu0 %v1886
  %v1888 = vpop.xlane.xlu0 %1887
  %v1889 = vsub.f32 %v1835, %v1867
  %v1890 = vsub.f32 %v1838, %v1870
  %v1891 = vsub.f32 %v1843, %v1873
  %v1892 = vsub.f32 %v1846, %v1876
  %v1893 = vsub.f32 %v1851, %v1879
  %v1894 = vsub.f32 %v1854, %v1882
  %v1895 = vsub.f32 %v1859, %v1885
  %v1896 = vsub.f32 %v1862, %v1888
  %v1897 = vmul.f32 %v1889, 1.442695
  %v1898 = vpow.pop %v1897
  %v1899 = vmul.f32 %v1890, 1.442695
  %v1900 = vpow.pop %v1899
  %v1901 = vmul.f32 %v1891, 1.442695
  %v1902 = vpow.pop %v1901
  %v1903 = vmul.f32 %v1892, 1.442695
  %v1904 = vpow.pop %v1903
  %v1905 = vmul.f32 %v1893, 1.442695
  %v1906 = vpow.pop %v1905
  %v1907 = vmul.f32 %v1894, 1.442695
  %v1908 = vpow.pop %v1907
  %v1909 = vmul.f32 %v1895, 1.442695
  %v1910 = vpow.pop %v1909
  %v1911 = vmul.f32 %v1896, 1.442695
  %v1912 = vpow.pop %v1911
  %v1913 = vsel %vm109, %v1898, 0.0
  %1914 = vadd.xlane.f32.xlu0 %v1913
  %v1915 = vpop.xlane.xlu0 %1914
  %v1916 = vsel %vm109, %v1900, 0.0
  %1917 = vadd.xlane.f32.xlu0 %v1916
  %v1918 = vpop.xlane.xlu0 %1917
  %v1919 = vsel %vm109, %v1902, 0.0
  %1920 = vadd.xlane.f32.xlu0 %v1919
  %v1921 = vpop.xlane.xlu0 %1920
  %v1922 = vsel %vm109, %v1904, 0.0
  %1923 = vadd.xlane.f32.xlu0 %v1922
  %v1924 = vpop.xlane.xlu0 %1923
  %v1925 = vsel %vm109, %v1906, 0.0
  %1926 = vadd.xlane.f32.xlu0 %v1925
  %v1927 = vpop.xlane.xlu0 %1926
  %v1928 = vsel %vm109, %v1908, 0.0
  %1929 = vadd.xlane.f32.xlu0 %v1928
  %v1930 = vpop.xlane.xlu0 %1929
  %v1931 = vsel %vm109, %v1910, 0.0
  %1932 = vadd.xlane.f32.xlu0 %v1931
  %v1933 = vpop.xlane.xlu0 %1932
  %v1934 = vsel %vm109, %v1912, 0.0
  %1935 = vadd.xlane.f32.xlu0 %v1934
  %v1936 = vpop.xlane.xlu0 %1935
  %v1937 = vrcp.pop %v1915
  %v1938 = vrcp.pop %v1918
  %v1939 = vrcp.pop %v1921
  %v1940 = vrcp.pop %v1924
  %v1941 = vrcp.pop %v1927
  %v1942 = vrcp.pop %v1930
  %v1943 = vrcp.pop %v1933
  %v1944 = vrcp.pop %v1936
  %v1945 = vmul.f32 %v1898, %v1937
  %v1946 = vmul.f32 %v1900, %v1938
  %v1947 = vmul.f32 %v1902, %v1939
  %v1948 = vmul.f32 %v1904, %v1940
  %v1949 = vmul.f32 %v1906, %v1941
  %v1950 = vmul.f32 %v1908, %v1942
  %v1951 = vmul.f32 %v1910, %v1943
  %v1952 = vmul.f32 %v1912, %v1944
  %v1953 = vpack.c.bf16 %v1946, %v1945
  %v1954 = vpack.c.bf16 %v1948, %v1947
  %v1955 = vpack.c.bf16 %v1950, %v1949
  %v1956 = vpack.c.bf16 %v1952, %v1951
  %v1958 = vsel %vm109, %v1953, 0
  %v1961 = vsel %vm109, %v1954, 0
  %v1964 = vsel %vm109, %v1955, 0
  %v1967 = vsel %vm109, %v1956, 0
  %1969 = vmatprep.subr.bf16.mxu0 0
  %1970 = vmatpush1.bf16.msra.mxu0 %v1784
  %1971 = vmatprep.subr.bf16.mxu0 0
  %1972 = vmatpush1.bf16.msra.mxu0 %v1785
  %1973 = vmatprep.subr.bf16.mxu0 0
  %1974 = vmatpush1.bf16.msra.mxu0 %v1786
  %1975 = vmatprep.subr.bf16.mxu0 0
  %1976 = vmatpush1.bf16.msra.mxu0 %v1787
  %1977 = vmatprep.subr.bf16.mxu0 0
  %1978 = vmatpush1.bf16.msra.mxu0 0
  %1979 = vmatprep.subr.bf16.mxu0 0
  %1980 = vmatpush1.bf16.msra.mxu0 0
  %1981 = vmatprep.subr.bf16.mxu0 0
  %1982 = vmatpush1.bf16.msra.mxu0 0
  %1983 = vmatprep.subr.bf16.mxu0 0
  %1984 = vmatpush1.bf16.msra.mxu0 0
  %1985 = vmatprep.subr.bf16.mxu0 0
  %1986 = vmatpush1.bf16.msra.mxu0 0
  %1987 = vmatprep.subr.bf16.mxu0 0
  %1988 = vmatpush1.bf16.msra.mxu0 0
  %1989 = vmatprep.subr.bf16.mxu0 0
  %1990 = vmatpush1.bf16.msra.mxu0 0
  %1991 = vmatprep.subr.bf16.mxu0 0
  %1992 = vmatpush1.bf16.msra.mxu0 0
  %1993 = vmatprep.subr.bf16.mxu0 0
  %1994 = vmatpush1.bf16.msra.mxu0 0
  %1995 = vmatprep.subr.bf16.mxu0 0
  %1996 = vmatpush1.bf16.msra.mxu0 0
  %1997 = vmatprep.subr.bf16.mxu0 0
  %1998 = vmatpush1.bf16.msra.mxu0 0
  %1999 = vmatprep.subr.bf16.mxu0 0
  %2000 = vmatpush1.bf16.msra.mxu0 0
  %2001 = vmatprep.mubr.bf16.mxu0 0
  %2002 = vmatmul.mubr.bf16.gmra.mrb[0].mxu0 %v1958
  %v2003 = vpop.f32.mrb[0].mxu0
  %v2004 = vadd.f32 0.0, %v2003
  %v2005 = vpop.f32.mrb[0].mxu0
  %v2006 = vpop.f32.mrb[0].mxu0
  %v2007 = vadd.f32 0.0, %v2006
  %v2008 = vpop.f32.mrb[0].mxu0
  %2009 = vmatprep.mubr.bf16.mxu0 0
  %2010 = vmatmul.mubr.bf16.gmra.mrb[0].mxu0 %v1961
  %v2011 = vpop.f32.mrb[0].mxu0
  %v2012 = vadd.f32 0.0, %v2011
  %v2013 = vpop.f32.mrb[0].mxu0
  %v2014 = vpop.f32.mrb[0].mxu0
  %v2015 = vadd.f32 0.0, %v2014
  %v2016 = vpop.f32.mrb[0].mxu0
  %2017 = vmatprep.mubr.bf16.mxu0 0
  %2018 = vmatmul.mubr.bf16.gmra.mrb[0].mxu0 %v1964
  %v2019 = vpop.f32.mrb[0].mxu0
  %v2020 = vadd.f32 0.0, %v2019
  %v2021 = vpop.f32.mrb[0].mxu0
  %v2022 = vpop.f32.mrb[0].mxu0
  %v2023 = vadd.f32 0.0, %v2022
  %v2024 = vpop.f32.mrb[0].mxu0
  %2025 = vmatprep.mubr.bf16.mxu0 0
  %2026 = vmatmul.mubr.bf16.gmra.mrb[0].mxu0 %v1967
  %v2027 = vpop.f32.mrb[0].mxu0
  %v2028 = vadd.f32 0.0, %v2027
  %v2029 = vpop.f32.mrb[0].mxu0
  %v2030 = vpop.f32.mrb[0].mxu0
  %v2031 = vadd.f32 0.0, %v2030
  %v2032 = vpop.f32.mrb[0].mxu0
  %2033 = vdwg.mxu0
  %v2034 = vpack.c.bf16 %v1777, %v1776
  %v2035 = vpack.c.bf16 %v1779, %v1778
  %v2036 = vpack.c.bf16 %v1781, %v1780
  %v2037 = vpack.c.bf16 %v1783, %v1782
  %v2039 = vsel %vm279, %v2034, 0
  %v2042 = vsel %vm279, %v2035, 0
  %v2045 = vsel %vm279, %v2036, 0
  %v2048 = vsel %vm279, %v2037, 0
  %2050 = vmatprep.subr.bf16.mxu0 0
  %2051 = vmatpush1.bf16.xpose.msra.mxu0 %v2039
  %2052 = vmatprep.subr.bf16.mxu0 0
  %2053 = vmatpush1.bf16.xpose.msra.mxu0 %v2042
  %2054 = vmatprep.subr.bf16.mxu0 0
  %2055 = vmatpush1.bf16.xpose.msra.mxu0 %v2045
  %2056 = vmatprep.subr.bf16.mxu0 0
  %2057 = vmatpush1.bf16.xpose.msra.mxu0 %v2048
  %2058 = vmatprep.subr.bf16.mxu0 0
  %2059 = vmatpush1.bf16.xpose.msra.mxu0 0
  %2060 = vmatprep.subr.bf16.mxu0 0
  %2061 = vmatpush1.bf16.xpose.msra.mxu0 0
  %2062 = vmatprep.subr.bf16.mxu0 0
  %2063 = vmatpush1.bf16.xpose.msra.mxu0 0
  %2064 = vmatprep.subr.bf16.mxu0 0
  %2065 = vmatpush1.bf16.xpose.msra.mxu0 0
  %2066 = vmatprep.subr.bf16.mxu0 0
  %2067 = vmatpush1.bf16.xpose.msra.mxu0 0
  %2068 = vmatprep.subr.bf16.mxu0 0
  %2069 = vmatpush1.bf16.xpose.msra.mxu0 0
  %2070 = vmatprep.subr.bf16.mxu0 0
  %2071 = vmatpush1.bf16.xpose.msra.mxu0 0
  %2072 = vmatprep.subr.bf16.mxu0 0
  %2073 = vmatpush1.bf16.xpose.msra.mxu0 0
  %2074 = vmatprep.subr.bf16.mxu0 0
  %2075 = vmatpush1.bf16.xpose.msra.mxu0 0
  %2076 = vmatprep.subr.bf16.mxu0 0
  %2077 = vmatpush1.bf16.xpose.msra.mxu0 0
  %2078 = vmatprep.subr.bf16.mxu0 0
  %2079 = vmatpush1.bf16.xpose.msra.mxu0 0
  %2080 = vmatprep.subr.bf16.mxu0 0
  %2081 = vmatpush1.bf16.xpose.msra.mxu0 0
  %2082 = vmatprep.mubr.bf16.mxu0 0
  %2083 = vmatmul.mubr.bf16.gmra.mrb[0].mxu0 %v2039
  %v2084 = vpop.f32.mrb[0].mxu0
  %v2085 = vadd.f32 %v52, %v2084
  %v2086 = vpop.f32.mrb[0].mxu0
  %v2087 = vpop.f32.mrb[0].mxu0
  %v2088 = vadd.f32 %v53, %v2087
  %v2089 = vpop.f32.mrb[0].mxu0
  %2090 = vmatprep.mubr.bf16.mxu0 0
  %2091 = vmatmul.mubr.bf16.gmra.mrb[0].mxu0 %v2042
  %v2092 = vpop.f32.mrb[0].mxu0
  %v2093 = vadd.f32 %v54, %v2092
  %v2094 = vpop.f32.mrb[0].mxu0
  %v2095 = vpop.f32.mrb[0].mxu0
  %v2096 = vadd.f32 %v55, %v2095
  %v2097 = vpop.f32.mrb[0].mxu0
  %2098 = vmatprep.mubr.bf16.mxu0 0
  %2099 = vmatmul.mubr.bf16.gmra.mrb[0].mxu0 %v2045
  %v2100 = vpop.f32.mrb[0].mxu0
  %v2101 = vadd.f32 %v56, %v2100
  %v2102 = vpop.f32.mrb[0].mxu0
  %v2103 = vpop.f32.mrb[0].mxu0
  %v2104 = vadd.f32 %v57, %v2103
  %v2105 = vpop.f32.mrb[0].mxu0
  %2106 = vmatprep.mubr.bf16.mxu0 0
  %2107 = vmatmul.mubr.bf16.gmra.mrb[0].mxu0 %v2048
  %v2108 = vpop.f32.mrb[0].mxu0
  %v2109 = vadd.f32 %v58, %v2108
  %v2110 = vpop.f32.mrb[0].mxu0
  %v2111 = vpop.f32.mrb[0].mxu0
  %v2112 = vadd.f32 %v59, %v2111
  %v2113 = vpop.f32.mrb[0].mxu0
  %2114 = vdwg.mxu0
  %v2115 = vsel %vm109, %v2085, -inf
  %2116 = vmax.xlane.f32.xlu0 %v2115
  %v2117 = vpop.xlane.xlu0 %2116
  %v2118 = vsel %vm109, %v2088, -inf
  %2119 = vmax.xlane.f32.xlu0 %v2118
  %v2120 = vpop.xlane.xlu0 %2119
  %v2121 = vsel %vm109, %v2093, -inf
  %2122 = vmax.xlane.f32.xlu0 %v2121
  %v2123 = vpop.xlane.xlu0 %2122
  %v2124 = vsel %vm109, %v2096, -inf
  %2125 = vmax.xlane.f32.xlu0 %v2124
  %v2126 = vpop.xlane.xlu0 %2125
  %v2127 = vsel %vm109, %v2101, -inf
  %2128 = vmax.xlane.f32.xlu0 %v2127
  %v2129 = vpop.xlane.xlu0 %2128
  %v2130 = vsel %vm109, %v2104, -inf
  %2131 = vmax.xlane.f32.xlu0 %v2130
  %v2132 = vpop.xlane.xlu0 %2131
  %v2133 = vsel %vm109, %v2109, -inf
  %2134 = vmax.xlane.f32.xlu0 %v2133
  %v2135 = vpop.xlane.xlu0 %2134
  %v2136 = vsel %vm109, %v2112, -inf
  %2137 = vmax.xlane.f32.xlu0 %v2136
  %v2138 = vpop.xlane.xlu0 %2137
  %v2139 = vsub.f32 %v2085, %v2117
  %v2140 = vsub.f32 %v2088, %v2120
  %v2141 = vsub.f32 %v2093, %v2123
  %v2142 = vsub.f32 %v2096, %v2126
  %v2143 = vsub.f32 %v2101, %v2129
  %v2144 = vsub.f32 %v2104, %v2132
  %v2145 = vsub.f32 %v2109, %v2135
  %v2146 = vsub.f32 %v2112, %v2138
  %v2147 = vmul.f32 %v2139, 1.442695
  %v2148 = vpow.pop %v2147
  %v2149 = vmul.f32 %v2140, 1.442695
  %v2150 = vpow.pop %v2149
  %v2151 = vmul.f32 %v2141, 1.442695
  %v2152 = vpow.pop %v2151
  %v2153 = vmul.f32 %v2142, 1.442695
  %v2154 = vpow.pop %v2153
  %v2155 = vmul.f32 %v2143, 1.442695
  %v2156 = vpow.pop %v2155
  %v2157 = vmul.f32 %v2144, 1.442695
  %v2158 = vpow.pop %v2157
  %v2159 = vmul.f32 %v2145, 1.442695
  %v2160 = vpow.pop %v2159
  %v2161 = vmul.f32 %v2146, 1.442695
  %v2162 = vpow.pop %v2161
  %v2163 = vsel %vm109, %v2148, 0.0
  %2164 = vadd.xlane.f32.xlu0 %v2163
  %v2165 = vpop.xlane.xlu0 %2164
  %v2166 = vsel %vm109, %v2150, 0.0
  %2167 = vadd.xlane.f32.xlu0 %v2166
  %v2168 = vpop.xlane.xlu0 %2167
  %v2169 = vsel %vm109, %v2152, 0.0
  %2170 = vadd.xlane.f32.xlu0 %v2169
  %v2171 = vpop.xlane.xlu0 %2170
  %v2172 = vsel %vm109, %v2154, 0.0
  %2173 = vadd.xlane.f32.xlu0 %v2172
  %v2174 = vpop.xlane.xlu0 %2173
  %v2175 = vsel %vm109, %v2156, 0.0
  %2176 = vadd.xlane.f32.xlu0 %v2175
  %v2177 = vpop.xlane.xlu0 %2176
  %v2178 = vsel %vm109, %v2158, 0.0
  %2179 = vadd.xlane.f32.xlu0 %v2178
  %v2180 = vpop.xlane.xlu0 %2179
  %v2181 = vsel %vm109, %v2160, 0.0
  %2182 = vadd.xlane.f32.xlu0 %v2181
  %v2183 = vpop.xlane.xlu0 %2182
  %v2184 = vsel %vm109, %v2162, 0.0
  %2185 = vadd.xlane.f32.xlu0 %v2184
  %v2186 = vpop.xlane.xlu0 %2185
  %v2187 = vrcp.pop %v2165
  %v2188 = vrcp.pop %v2168
  %v2189 = vrcp.pop %v2171
  %v2190 = vrcp.pop %v2174
  %v2191 = vrcp.pop %v2177
  %v2192 = vrcp.pop %v2180
  %v2193 = vrcp.pop %v2183
  %v2194 = vrcp.pop %v2186
  %v2195 = vmul.f32 %v2148, %v2187
  %v2196 = vmul.f32 %v2150, %v2188
  %v2197 = vmul.f32 %v2152, %v2189
  %v2198 = vmul.f32 %v2154, %v2190
  %v2199 = vmul.f32 %v2156, %v2191
  %v2200 = vmul.f32 %v2158, %v2192
  %v2201 = vmul.f32 %v2160, %v2193
  %v2202 = vmul.f32 %v2162, %v2194
  %v2203 = vpack.c.bf16 %v2196, %v2195
  %v2204 = vpack.c.bf16 %v2198, %v2197
  %v2205 = vpack.c.bf16 %v2200, %v2199
  %v2206 = vpack.c.bf16 %v2202, %v2201
  %v2208 = vsel %vm109, %v2203, 0
  %v2211 = vsel %vm109, %v2204, 0
  %v2214 = vsel %vm109, %v2205, 0
  %v2217 = vsel %vm109, %v2206, 0
  %2219 = vmatprep.subr.bf16.mxu0 0
  %2220 = vmatpush1.bf16.msra.mxu0 %v2034
  %2221 = vmatprep.subr.bf16.mxu0 0
  %2222 = vmatpush1.bf16.msra.mxu0 %v2035
  %2223 = vmatprep.subr.bf16.mxu0 0
  %2224 = vmatpush1.bf16.msra.mxu0 %v2036
  %2225 = vmatprep.subr.bf16.mxu0 0
  %2226 = vmatpush1.bf16.msra.mxu0 %v2037
  %2227 = vmatprep.subr.bf16.mxu0 0
  %2228 = vmatpush1.bf16.msra.mxu0 0
  %2229 = vmatprep.subr.bf16.mxu0 0
  %2230 = vmatpush1.bf16.msra.mxu0 0
  %2231 = vmatprep.subr.bf16.mxu0 0
  %2232 = vmatpush1.bf16.msra.mxu0 0
  %2233 = vmatprep.subr.bf16.mxu0 0
  %2234 = vmatpush1.bf16.msra.mxu0 0
  %2235 = vmatprep.subr.bf16.mxu0 0
  %2236 = vmatpush1.bf16.msra.mxu0 0
  %2237 = vmatprep.subr.bf16.mxu0 0
  %2238 = vmatpush1.bf16.msra.mxu0 0
  %2239 = vmatprep.subr.bf16.mxu0 0
  %2240 = vmatpush1.bf16.msra.mxu0 0
  %2241 = vmatprep.subr.bf16.mxu0 0
  %2242 = vmatpush1.bf16.msra.mxu0 0
  %2243 = vmatprep.subr.bf16.mxu0 0
  %2244 = vmatpush1.bf16.msra.mxu0 0
  %2245 = vmatprep.subr.bf16.mxu0 0
  %2246 = vmatpush1.bf16.msra.mxu0 0
  %2247 = vmatprep.subr.bf16.mxu0 0
  %2248 = vmatpush1.bf16.msra.mxu0 0
  %2249 = vmatprep.subr.bf16.mxu0 0
  %2250 = vmatpush1.bf16.msra.mxu0 0
  %2251 = vmatprep.mubr.bf16.mxu0 0
  %2252 = vmatmul.mubr.bf16.gmra.mrb[0].mxu0 %v2208
  %v2253 = vpop.f32.mrb[0].mxu0
  %v2254 = vadd.f32 0.0, %v2253
  %v2255 = vpop.f32.mrb[0].mxu0
  %v2256 = vpop.f32.mrb[0].mxu0
  %v2257 = vadd.f32 0.0, %v2256
  %v2258 = vpop.f32.mrb[0].mxu0
  %2259 = vmatprep.mubr.bf16.mxu0 0
  %2260 = vmatmul.mubr.bf16.gmra.mrb[0].mxu0 %v2211
  %v2261 = vpop.f32.mrb[0].mxu0
  %v2262 = vadd.f32 0.0, %v2261
  %v2263 = vpop.f32.mrb[0].mxu0
  %v2264 = vpop.f32.mrb[0].mxu0
  %v2265 = vadd.f32 0.0, %v2264
  %v2266 = vpop.f32.mrb[0].mxu0
  %2267 = vmatprep.mubr.bf16.mxu0 0
  %2268 = vmatmul.mubr.bf16.gmra.mrb[0].mxu0 %v2214
  %v2269 = vpop.f32.mrb[0].mxu0
  %v2270 = vadd.f32 0.0, %v2269
  %v2271 = vpop.f32.mrb[0].mxu0
  %v2272 = vpop.f32.mrb[0].mxu0
  %v2273 = vadd.f32 0.0, %v2272
  %v2274 = vpop.f32.mrb[0].mxu0
  %2275 = vmatprep.mubr.bf16.mxu0 0
  %2276 = vmatmul.mubr.bf16.gmra.mrb[0].mxu0 %v2217
  %v2277 = vpop.f32.mrb[0].mxu0
  %v2278 = vadd.f32 0.0, %v2277
  %v2279 = vpop.f32.mrb[0].mxu0
  %v2280 = vpop.f32.mrb[0].mxu0
  %v2281 = vadd.f32 0.0, %v2280
  %v2282 = vpop.f32.mrb[0].mxu0
  %2283 = vdwg.mxu0
  %v2284 = vpack.c.bf16 %v2007, %v2004
  %v2285 = vpack.c.bf16 %v2015, %v2012
  %v2286 = vpack.c.bf16 %v2023, %v2020
  %v2287 = vpack.c.bf16 %v2031, %v2028
  %v2288 = vpack.c.bf16 %v2257, %v2254
  %v2289 = vpack.c.bf16 %v2265, %v2262
  %v2290 = vpack.c.bf16 %v2273, %v2270
  %v2291 = vpack.c.bf16 %v2281, %v2278
  %v2296 = vunpack.c.l.b16 %v64
  %v2297 = vunpack.c.l.b16 %v65
  %v2298 = vunpack.c.l.b16 %v66
  %v2299 = vunpack.c.l.b16 %v67
  %v2300 = vpack.c.b16 %v2297, %v2296
  %v2301 = vpack.c.b16 %v2299, %v2298
  %v2305 = vsel %vm279, %v2288, 0
  %v2308 = vsel %vm279, %v2289, 0
  %v2311 = vsel %vm279, %v2290, 0
  %v2314 = vsel %vm279, %v2291, 0
  %2316 = vmatprep.subr.bf16.mxu0 0
  %2317 = vmatpush1.bf16.msra.mxu0 %v2300
  %2318 = vmatprep.subr.bf16.mxu0 0
  %2319 = vmatpush1.bf16.msra.mxu0 %v2301
  %2320 = vmatprep.subr.bf16.mxu0 0
  %2321 = vmatpush1.bf16.msra.mxu0 0
  %2322 = vmatprep.subr.bf16.mxu0 0
  %2323 = vmatpush1.bf16.msra.mxu0 0
  %2324 = vmatprep.subr.bf16.mxu0 0
  %2325 = vmatpush1.bf16.msra.mxu0 0
  %2326 = vmatprep.subr.bf16.mxu0 0
  %2327 = vmatpush1.bf16.msra.mxu0 0
  %2328 = vmatprep.subr.bf16.mxu0 0
  %2329 = vmatpush1.bf16.msra.mxu0 0
  %2330 = vmatprep.subr.bf16.mxu0 0
  %2331 = vmatpush1.bf16.msra.mxu0 0
  %2332 = vmatprep.subr.bf16.mxu0 0
  %2333 = vmatpush1.bf16.msra.mxu0 0
  %2334 = vmatprep.subr.bf16.mxu0 0
  %2335 = vmatpush1.bf16.msra.mxu0 0
  %2336 = vmatprep.subr.bf16.mxu0 0
  %2337 = vmatpush1.bf16.msra.mxu0 0
  %2338 = vmatprep.subr.bf16.mxu0 0
  %2339 = vmatpush1.bf16.msra.mxu0 0
  %2340 = vmatprep.subr.bf16.mxu0 0
  %2341 = vmatpush1.bf16.msra.mxu0 0
  %2342 = vmatprep.subr.bf16.mxu0 0
  %2343 = vmatpush1.bf16.msra.mxu0 0
  %2344 = vmatprep.subr.bf16.mxu0 0
  %2345 = vmatpush1.bf16.msra.mxu0 0
  %2346 = vmatprep.subr.bf16.mxu0 0
  %2347 = vmatpush1.bf16.msra.mxu0 0
  %2348 = vmatprep.mubr.bf16.mxu0 0
  %2349 = vmatmul.mubr.bf16.gmra.mrb[0].mxu0 %v2305
  %v2350 = vpop.f32.mrb[0].mxu0
  %v2351 = vadd.f32 0.0, %v2350
  %v2352 = vpop.f32.mrb[0].mxu0
  %v2353 = vpop.f32.mrb[0].mxu0
  %v2354 = vadd.f32 0.0, %v2353
  %v2355 = vpop.f32.mrb[0].mxu0
  %2356 = vmatprep.mubr.bf16.mxu0 0
  %2357 = vmatmul.mubr.bf16.gmra.mrb[0].mxu0 %v2308
  %v2358 = vpop.f32.mrb[0].mxu0
  %v2359 = vadd.f32 0.0, %v2358
  %v2360 = vpop.f32.mrb[0].mxu0
  %v2361 = vpop.f32.mrb[0].mxu0
  %v2362 = vadd.f32 0.0, %v2361
  %v2363 = vpop.f32.mrb[0].mxu0
  %2364 = vmatprep.mubr.bf16.mxu0 0
  %2365 = vmatmul.mubr.bf16.gmra.mrb[0].mxu0 %v2311
  %v2366 = vpop.f32.mrb[0].mxu0
  %v2367 = vadd.f32 0.0, %v2366
  %v2368 = vpop.f32.mrb[0].mxu0
  %v2369 = vpop.f32.mrb[0].mxu0
  %v2370 = vadd.f32 0.0, %v2369
  %v2371 = vpop.f32.mrb[0].mxu0
  %2372 = vmatprep.mubr.bf16.mxu0 0
  %2373 = vmatmul.mubr.bf16.gmra.mrb[0].mxu0 %v2314
  %v2374 = vpop.f32.mrb[0].mxu0
  %v2375 = vadd.f32 0.0, %v2374
  %v2376 = vpop.f32.mrb[0].mxu0
  %v2377 = vpop.f32.mrb[0].mxu0
  %v2378 = vadd.f32 0.0, %v2377
  %v2379 = vpop.f32.mrb[0].mxu0
  %2380 = vdwg.mxu0
  %v2385 = vunpack.c.l.b16 %v60
  %v2386 = vunpack.c.l.b16 %v61
  %v2387 = vunpack.c.l.b16 %v62
  %v2388 = vunpack.c.l.b16 %v63
  %v2389 = vpack.c.b16 %v2386, %v2385
  %v2390 = vpack.c.b16 %v2388, %v2387
  %v2394 = vsel %vm279, %v2284, 0
  %v2397 = vsel %vm279, %v2285, 0
  %v2400 = vsel %vm279, %v2286, 0
  %v2403 = vsel %vm279, %v2287, 0
  %2405 = vmatprep.subr.bf16.mxu0 0
  %2406 = vmatpush1.bf16.msra.mxu0 %v2389
  %2407 = vmatprep.subr.bf16.mxu0 0
  %2408 = vmatpush1.bf16.msra.mxu0 %v2390
  %2409 = vmatprep.subr.bf16.mxu0 0
  %2410 = vmatpush1.bf16.msra.mxu0 0
  %2411 = vmatprep.subr.bf16.mxu0 0
  %2412 = vmatpush1.bf16.msra.mxu0 0
  %2413 = vmatprep.subr.bf16.mxu0 0
  %2414 = vmatpush1.bf16.msra.mxu0 0
  %2415 = vmatprep.subr.bf16.mxu0 0
  %2416 = vmatpush1.bf16.msra.mxu0 0
  %2417 = vmatprep.subr.bf16.mxu0 0
  %2418 = vmatpush1.bf16.msra.mxu0 0
  %2419 = vmatprep.subr.bf16.mxu0 0
  %2420 = vmatpush1.bf16.msra.mxu0 0
  %2421 = vmatprep.subr.bf16.mxu0 0
  %2422 = vmatpush1.bf16.msra.mxu0 0
  %2423 = vmatprep.subr.bf16.mxu0 0
  %2424 = vmatpush1.bf16.msra.mxu0 0
  %2425 = vmatprep.subr.bf16.mxu0 0
  %2426 = vmatpush1.bf16.msra.mxu0 0
  %2427 = vmatprep.subr.bf16.mxu0 0
  %2428 = vmatpush1.bf16.msra.mxu0 0
  %2429 = vmatprep.subr.bf16.mxu0 0
  %2430 = vmatpush1.bf16.msra.mxu0 0
  %2431 = vmatprep.subr.bf16.mxu0 0
  %2432 = vmatpush1.bf16.msra.mxu0 0
  %2433 = vmatprep.subr.bf16.mxu0 0
  %2434 = vmatpush1.bf16.msra.mxu0 0
  %2435 = vmatprep.subr.bf16.mxu0 0
  %2436 = vmatpush1.bf16.msra.mxu0 0
  %2437 = vmatprep.mubr.bf16.mxu0 0
  %2438 = vmatmul.mubr.bf16.gmra.mrb[0].mxu0 %v2394
  %v2439 = vpop.f32.mrb[0].mxu0
  %v2440 = vadd.f32 %v2351, %v2439
  %v2441 = vpop.f32.mrb[0].mxu0
  %v2442 = vpop.f32.mrb[0].mxu0
  %v2443 = vadd.f32 %v2354, %v2442
  %v2444 = vpop.f32.mrb[0].mxu0
  %2445 = vmatprep.mubr.bf16.mxu0 0
  %2446 = vmatmul.mubr.bf16.gmra.mrb[0].mxu0 %v2397
  %v2447 = vpop.f32.mrb[0].mxu0
  %v2448 = vadd.f32 %v2359, %v2447
  %v2449 = vpop.f32.mrb[0].mxu0
  %v2450 = vpop.f32.mrb[0].mxu0
  %v2451 = vadd.f32 %v2362, %v2450
  %v2452 = vpop.f32.mrb[0].mxu0
  %2453 = vmatprep.mubr.bf16.mxu0 0
  %2454 = vmatmul.mubr.bf16.gmra.mrb[0].mxu0 %v2400
  %v2455 = vpop.f32.mrb[0].mxu0
  %v2456 = vadd.f32 %v2367, %v2455
  %v2457 = vpop.f32.mrb[0].mxu0
  %v2458 = vpop.f32.mrb[0].mxu0
  %v2459 = vadd.f32 %v2370, %v2458
  %v2460 = vpop.f32.mrb[0].mxu0
  %2461 = vmatprep.mubr.bf16.mxu0 0
  %2462 = vmatmul.mubr.bf16.gmra.mrb[0].mxu0 %v2403
  %v2463 = vpop.f32.mrb[0].mxu0
  %v2464 = vadd.f32 %v2375, %v2463
  %v2465 = vpop.f32.mrb[0].mxu0
  %v2466 = vpop.f32.mrb[0].mxu0
  %v2467 = vadd.f32 %v2378, %v2466
  %v2468 = vpop.f32.mrb[0].mxu0
  %2469 = vdwg.mxu0
  %v2471 = vlaneseq
  %v2472 = vshrl.u32 %v2471, 7
  %v2473 = vsub.s32 0, %v2472
  %v2474 = vrot.slane %v68, %v2473
  %v2476 = vadd.f32 %v2440, %v2474
  %v2477 = vadd.f32 %v2443, %v2474
  %v2478 = vadd.f32 %v2448, %v2474
  %v2479 = vadd.f32 %v2451, %v2474
  %v2480 = vadd.f32 %v2456, %v2474
  %v2481 = vadd.f32 %v2459, %v2474
  %v2482 = vadd.f32 %v2464, %v2474
  %v2483 = vadd.f32 %v2467, %v2474
  %2484 = vst.msk [vmem:[%s6] sm:$0xff] %vm279, %v2476
  %2485 = vst.msk [vmem:[%s6 + $0x8] sm:$0xff] %vm279, %v2477
  %2486 = vst.msk [vmem:[%s6 + $0x10] sm:$0xff] %vm279, %v2478
  %2487 = vst.msk [vmem:[%s6 + $0x18] sm:$0xff] %vm279, %v2479
  %2488 = vst.msk [vmem:[%s6 + $0x20] sm:$0xff] %vm279, %v2480
  %2489 = vst.msk [vmem:[%s6 + $0x28] sm:$0xff] %vm279, %v2481
  %2490 = vst.msk [vmem:[%s6 + $0x30] sm:$0xff] %vm279, %v2482
  %2491 = vst.msk [vmem:[%s6 + $0x38] sm:$0xff] %vm279, %v2483
  // Predicated region
  $region26: #{tpu_custom_call.1} parent=0 // pred_check
    _
  $region27: #{tpu_custom_call.1} parent=0 // pred_check_branch
    %2493 = sbr.rel (0) target = $region29
  $region28: #{tpu_custom_call.1} parent=0 // pred_region
    _
  $region29: #{tpu_custom_call.1} parent=0 // pred_fallthru
    _
  // Predicated region
  $region30: #{tpu_custom_call.1} parent=0 // pred_check
    _
  $region31: #{tpu_custom_call.1} parent=0 // pred_check_branch
    %2495 = sbr.rel (0) target = $region33
  $region32: #{tpu_custom_call.1} parent=0 // pred_region
    _
  $region33: #{tpu_custom_call.1} parent=0 // pred_fallthru
    _

</llo_original>
